<compile_context>
chip_gen: v6e
topology: v6e:2x2x1
jax: 0.10.0
libtpu: 0.0.40
codegen_flags: <defaults>
</compile_context>

<pallas_src>
import functools

import jax
import jax.numpy as jnp
from jax.experimental import pallas as pl
from jax.experimental.pallas import tpu as pltpu

LANE = 128
SUBLANE = 8


# -----------------------------------------------------------------------------
# Fused Pallas kernel: 3x SAGEConv + mean-pool + Linear, all on the MXU.
# Operands bf16, accumulation f32, bias/ReLU f32.
# -----------------------------------------------------------------------------
def _sage_fused_kernel(a_ref, p_ref, x_ref,
                       w1l_ref, w1r_ref, b1_ref,
                       w2l_ref, w2r_ref, b2_ref,
                       w3l_ref, w3r_ref, b3_ref,
                       wlin_ref, blin_ref, o_ref):
    a = a_ref[...]          # [Np, Np] bf16 row-normalized adjacency (padded)
    h = x_ref[...]          # [Np, Fp] bf16 lane-padded node features

    def conv(h_bf16, wl_ref, wr_ref, b_ref, relu):
        # Neighbor aggregation on the MXU, f32 accumulation.
        agg = jnp.dot(a, h_bf16, preferred_element_type=jnp.float32)
        # Two separate projections (no concat temp): agg @ Wl + h @ Wr + b.
        out = (jnp.dot(agg.astype(jnp.bfloat16), wl_ref[...],
                       preferred_element_type=jnp.float32)
               + jnp.dot(h_bf16, wr_ref[...],
                         preferred_element_type=jnp.float32)
               + b_ref[...])                                    # bias f32
        if relu:
            out = jnp.maximum(out, 0.0)
        return out.astype(jnp.bfloat16)

    h = conv(h, w1l_ref, w1r_ref, b1_ref, relu=True)
    h = conv(h, w2l_ref, w2r_ref, b2_ref, relu=True)
    h = conv(h, w3l_ref, w3r_ref, b3_ref, relu=False)

    # global mean pool + Linear (dropout is identity in eval mode).
    # Pool first (cheap order: G rows, not N rows, hit the linear).
    pooled = jnp.dot(p_ref[...], h, preferred_element_type=jnp.float32)
    out = jnp.dot(pooled.astype(jnp.bfloat16), wlin_ref[...],
                  preferred_element_type=jnp.float32)
    o_ref[...] = (out + blin_ref[...]).astype(o_ref.dtype)


def _full_vmem():
    # Tiny problem: single grid point, whole arrays resident in VMEM.
    return pl.BlockSpec(memory_space=pltpu.MemorySpace.VMEM)


def sage_fused_call(a_mean, pool_mat, x_pad, packed):
    gp = pool_mat.shape[0]
    out_pad = packed["lin_w"].shape[1]
    out = pl.pallas_call(
        _sage_fused_kernel,
        out_shape=jax.ShapeDtypeStruct((gp, out_pad), jnp.float32),
        in_specs=[_full_vmem()] * 14,
        out_specs=_full_vmem(),
        compiler_params=pltpu.CompilerParams(
            vmem_limit_bytes=64 * 1024 * 1024),
    )(a_mean, pool_mat, x_pad,
      packed["c1_wl"], packed["c1_wr"], packed["c1_b"],
      packed["c2_wl"], packed["c2_wr"], packed["c2_b"],
      packed["c3_wl"], packed["c3_wr"], packed["c3_b"],
      packed["lin_w"], packed["lin_b"])
    return out


# -----------------------------------------------------------------------------
# Static-topology preprocessing (built ONCE, outside the hot forward).
# One-hot matmul formulation -- no per-edge scatter-add.
# -----------------------------------------------------------------------------
def _round_up(n, m):
    return ((n + m - 1) // m) * m


def build_mean_adjacency_padded(edge_index, num_nodes, num_nodes_pad):
    """A[i, j] = 1/deg_in(i) if edge j -> i, zero-padded to [Np, Np], bf16."""
    src, dst = edge_index[0], edge_index[1]
    node_ids = jnp.arange(num_nodes_pad, dtype=jnp.int32)
    dst_oh = (node_ids[:, None] == dst[None, :]).astype(jnp.float32)   # [Np,E]
    src_oh = (src[:, None] == node_ids[None, :]).astype(jnp.float32)   # [E,Np]
    a = dst_oh @ src_oh                                                # [Np,Np]
    deg = a.sum(axis=1, keepdims=True)
    a = a / jnp.maximum(deg, 1.0)
    del num_nodes  # rows/cols >= num_nodes are already exactly zero
    return a.astype(jnp.bfloat16)


def build_mean_pool_padded(batch, num_graphs_pad, num_nodes_pad):
    """P[g, n] = 1/|V_g| if batch[n] == g, zero-padded to [Gp, Np], bf16."""
    n = batch.shape[0]
    batch_pad = jnp.full((num_nodes_pad,), -1, jnp.int32).at[:n].set(
        batch.astype(jnp.int32))
    g_ids = jnp.arange(num_graphs_pad, dtype=jnp.int32)
    p = (g_ids[:, None] == batch_pad[None, :]).astype(jnp.float32)     # [Gp,Np]
    counts = p.sum(axis=1, keepdims=True)
    return (p / jnp.maximum(counts, 1.0)).astype(jnp.bfloat16)


def pad_features(x, num_nodes_pad, feat_pad):
    pr, pc = num_nodes_pad - x.shape[0], feat_pad - x.shape[1]
    return jnp.pad(x, ((0, pr), (0, pc))).astype(jnp.bfloat16)


def prepare_graph(x, edge_index, batch, num_nodes, num_graphs, features_in):
    """Everything that only depends on the (static) topology + raw features."""
    np_pad = _round_up(num_nodes, LANE)
    gp_pad = _round_up(num_graphs, SUBLANE)
    fp_pad = _round_up(features_in, LANE)
    a_mean = build_mean_adjacency_padded(edge_index, num_nodes, np_pad)
    pool_mat = build_mean_pool_padded(batch, gp_pad, np_pad)
    x_pad = pad_features(x, np_pad, fp_pad)
    return a_mean, pool_mat, x_pad


# -----------------------------------------------------------------------------
# Parameter init / packing.
# -----------------------------------------------------------------------------
def _pad2d(arr, rows, cols):
    pr, pc = rows - arr.shape[0], cols - arr.shape[1]
    if pr == 0 and pc == 0:
        return arr
    return jnp.pad(arr, ((0, pr), (0, pc)))


def init_linear(key, fan_in, fan_out, bias=True):
    """Deterministic init mimicking torch.nn.Linear (kaiming-uniform-ish)."""
    kw, kb = jax.random.split(key)
    bound = 1.0 / jnp.sqrt(jnp.float32(fan_in))
    # Stored already transposed: shape (fan_in, fan_out) so kernels do X @ W.
    w = jax.random.uniform(kw, (fan_in, fan_out), jnp.float32, -bound, bound)
    if bias:
        b = jax.random.uniform(kb, (1, fan_out), jnp.float32, -bound, bound)
    else:
        b = jnp.zeros((1, fan_out), jnp.float32)
    return w, b


def init_sage_params(key, hidden_channels, features_in, features_out):
    keys = jax.random.split(key, 7)
    params = {}
    # SAGEConv(in, out): lin_l (neighbor, bias=True), lin_r (root, bias=False).
    params["c1_wl"], params["c1_b"] = init_linear(keys[0], features_in, hidden_channels)
    params["c1_wr"], _ = init_linear(keys[1], features_in, hidden_channels, bias=False)
    params["c2_wl"], params["c2_b"] = init_linear(keys[2], hidden_channels, hidden_channels)
    params["c2_wr"], _ = init_linear(keys[3], hidden_channels, hidden_channels, bias=False)
    params["c3_wl"], params["c3_b"] = init_linear(keys[4], hidden_channels, hidden_channels)
    params["c3_wr"], _ = init_linear(keys[5], hidden_channels, hidden_channels, bias=False)
    params["lin_w"], params["lin_b"] = init_linear(keys[6], hidden_channels, features_out)
    return params


def pack_params(params, hidden_channels, features_in, features_out):
    """Pad feature dims to 128 lanes; weights in bf16, biases in f32."""
    fp = _round_up(features_in, LANE)
    hp = _round_up(hidden_channels, LANE)
    op = _round_up(features_out, LANE)

    def w16(w, r, c):
        return _pad2d(w, r, c).astype(jnp.bfloat16)

    packed = {
        "c1_wl": w16(params["c1_wl"], fp, hp),
        "c1_wr": w16(params["c1_wr"], fp, hp),
        "c1_b": _pad2d(params["c1_b"], 1, hp),
        "c2_wl": w16(params["c2_wl"], hp, hp),
        "c2_wr": w16(params["c2_wr"], hp, hp),
        "c2_b": _pad2d(params["c2_b"], 1, hp),
        "c3_wl": w16(params["c3_wl"], hp, hp),
        "c3_wr": w16(params["c3_wr"], hp, hp),
        "c3_b": _pad2d(params["c3_b"], 1, hp),
        "lin_w": w16(params["lin_w"], hp, op),
        "lin_b": _pad2d(params["lin_b"], 1, op),
    }
    return packed


# -----------------------------------------------------------------------------
# Hot-path forward: only the fused Pallas call + output slice.
# -----------------------------------------------------------------------------
@functools.partial(jax.jit, static_argnums=(4, 5))
def sage_forward(packed, a_mean, pool_mat, x_pad, num_graphs, features_out):
    out_pad = sage_fused_call(a_mean, pool_mat, x_pad, packed)
    return out_pad[:num_graphs, :features_out]


# Pure-JAX f32 reference (unpadded, unfused) for correctness checking.
def sage_reference(params, x, edge_index, batch, num_graphs):
    src, dst = edge_index[0], edge_index[1]
    n = x.shape[0]
    a = jnp.zeros((n, n), jnp.float32).at[dst, src].add(1.0)
    a = a / jnp.maximum(a.sum(axis=1, keepdims=True), 1.0)
    p = (jnp.arange(num_graphs)[:, None] == batch[None, :]).astype(jnp.float32)
    p = p / jnp.maximum(p.sum(axis=1, keepdims=True), 1.0)

    def conv(h, wl, wr, b, relu):
        out = (a @ h) @ wl + h @ wr + b
        return jnp.maximum(out, 0.0) if relu else out

    h = conv(x, params["c1_wl"], params["c1_wr"], params["c1_b"], True)
    h = conv(h, params["c2_wl"], params["c2_wr"], params["c2_b"], True)
    h = conv(h, params["c3_wl"], params["c3_wr"], params["c3_b"], False)
    return (p @ h) @ params["lin_w"] + params["lin_b"]


# -----------------------------------------------------------------------------
# Main
# -----------------------------------------------------------------------------
if __name__ == "__main__":
    hidden_channels = 32
    features_in = 16
    features_out = 8

    num_nodes = 24
    num_edges = 64
    num_graphs = 2

    key = jax.random.PRNGKey(0)
    k_x, k_src, k_dst, k_params = jax.random.split(key, 4)

    x = jax.random.normal(k_x, (num_nodes, features_in), jnp.float32)
    src = jax.random.randint(k_src, (num_edges,), 0, num_nodes, jnp.int32)
    dst = jax.random.randint(k_dst, (num_edges,), 0, num_nodes, jnp.int32)
    edge_index = jnp.stack([src, dst], axis=0)            # [2, E]
    # First half of the nodes -> graph 0, second half -> graph 1.
    batch = (jnp.arange(num_nodes) >= num_nodes // 2).astype(jnp.int32)

    params = init_sage_params(k_params, hidden_channels, features_in, features_out)
    packed = pack_params(params, hidden_channels, features_in, features_out)

    # Static topology: built once, OUTSIDE the jitted forward (one-hot matmul,
    # no scatter-add in the hot path), then reused across forward calls.
    a_mean, pool_mat, x_pad = prepare_graph(
        x, edge_index, batch, num_nodes, num_graphs, features_in)
    a_mean, pool_mat, x_pad = jax.block_until_ready((a_mean, pool_mat, x_pad))

    out = sage_forward(packed, a_mean, pool_mat, x_pad, num_graphs, features_out)
    out = jax.block_until_ready(out)

    assert out.shape == (num_graphs, features_out)
    assert jnp.all(jnp.isfinite(out))

    ref = sage_reference(params, x, edge_index, batch, num_graphs)
    # bf16 operands with f32 accumulation over 3 stacked matmuls: ~1e-2 rel.
    assert jnp.allclose(out, ref, atol=5e-2, rtol=5e-2), (out, ref)

    print("KERNEL_OK")
</pallas_src>

<mosaic_0001>
module attributes {stable_mosaic.version = 11 : i64} {
  func.func @_sage_fused_kernel(%arg0: memref<128x128xbf16, #tpu.memory_space<vmem>>, %arg1: memref<8x128xbf16, #tpu.memory_space<vmem>>, %arg2: memref<128x128xbf16, #tpu.memory_space<vmem>>, %arg3: memref<128x128xbf16, #tpu.memory_space<vmem>>, %arg4: memref<128x128xbf16, #tpu.memory_space<vmem>>, %arg5: memref<1x128xf32, #tpu.memory_space<vmem>>, %arg6: memref<128x128xbf16, #tpu.memory_space<vmem>>, %arg7: memref<128x128xbf16, #tpu.memory_space<vmem>>, %arg8: memref<1x128xf32, #tpu.memory_space<vmem>>, %arg9: memref<128x128xbf16, #tpu.memory_space<vmem>>, %arg10: memref<128x128xbf16, #tpu.memory_space<vmem>>, %arg11: memref<1x128xf32, #tpu.memory_space<vmem>>, %arg12: memref<128x128xbf16, #tpu.memory_space<vmem>>, %arg13: memref<1x128xf32, #tpu.memory_space<vmem>>, %arg14: memref<8x128xf32, #tpu.memory_space<vmem>>) attributes {dimension_semantics = [], scalar_prefetch = 0 : i64, scratch_operands = 0 : i64, tpu.core_type = #tpu.core_type<tc>} {
    %c0 = arith.constant 0 : index
    %c0_0 = arith.constant 0 : index
    %0 = vector.load %arg0[%c0, %c0_0] : memref<128x128xbf16, #tpu.memory_space<vmem>>, vector<128x128xbf16>
    %c0_1 = arith.constant 0 : index
    %c0_2 = arith.constant 0 : index
    %1 = vector.load %arg2[%c0_1, %c0_2] : memref<128x128xbf16, #tpu.memory_space<vmem>>, vector<128x128xbf16>
    %cst = arith.constant dense<0.000000e+00> : vector<128x128xf32>
    %2 = tpu.matmul %0, %1, %cst {dimension_numbers = #tpu.dot_dimension_numbers<[1], [0], [0], [1], [0, 0, 1, 1], [], []>} : vector<128x128xbf16>, vector<128x128xbf16>, vector<128x128xf32> -> vector<128x128xf32>
    %3 = arith.truncf %2 : vector<128x128xf32> to vector<128x128xbf16>
    %c0_3 = arith.constant 0 : index
    %c0_4 = arith.constant 0 : index
    %4 = vector.load %arg3[%c0_3, %c0_4] : memref<128x128xbf16, #tpu.memory_space<vmem>>, vector<128x128xbf16>
    %cst_5 = arith.constant dense<0.000000e+00> : vector<128x128xf32>
    %5 = tpu.matmul %3, %4, %cst_5 {dimension_numbers = #tpu.dot_dimension_numbers<[1], [0], [0], [1], [0, 0, 1, 1], [], []>} : vector<128x128xbf16>, vector<128x128xbf16>, vector<128x128xf32> -> vector<128x128xf32>
    %c0_6 = arith.constant 0 : index
    %c0_7 = arith.constant 0 : index
    %6 = vector.load %arg4[%c0_6, %c0_7] : memref<128x128xbf16, #tpu.memory_space<vmem>>, vector<128x128xbf16>
    %cst_8 = arith.constant dense<0.000000e+00> : vector<128x128xf32>
    %7 = tpu.matmul %1, %6, %cst_8 {dimension_numbers = #tpu.dot_dimension_numbers<[1], [0], [0], [1], [0, 0, 1, 1], [], []>} : vector<128x128xbf16>, vector<128x128xbf16>, vector<128x128xf32> -> vector<128x128xf32>
    %8 = arith.addf %5, %7 : vector<128x128xf32>
    %c0_9 = arith.constant 0 : index
    %c0_10 = arith.constant 0 : index
    %9 = vector.load %arg5[%c0_9, %c0_10] : memref<1x128xf32, #tpu.memory_space<vmem>>, vector<1x128xf32>
    %10 = vector.broadcast %9 : vector<1x128xf32> to vector<128x128xf32>
    %11 = arith.addf %8, %10 : vector<128x128xf32>
    %cst_11 = arith.constant 0.000000e+00 : f32
    %12 = vector.broadcast %cst_11 : f32 to vector<128x128xf32>
    %13 = arith.maximumf %11, %12 : vector<128x128xf32>
    %14 = arith.truncf %13 : vector<128x128xf32> to vector<128x128xbf16>
    %cst_12 = arith.constant dense<0.000000e+00> : vector<128x128xf32>
    %15 = tpu.matmul %0, %14, %cst_12 {dimension_numbers = #tpu.dot_dimension_numbers<[1], [0], [0], [1], [0, 0, 1, 1], [], []>} : vector<128x128xbf16>, vector<128x128xbf16>, vector<128x128xf32> -> vector<128x128xf32>
    %16 = arith.truncf %15 : vector<128x128xf32> to vector<128x128xbf16>
    %c0_13 = arith.constant 0 : index
    %c0_14 = arith.constant 0 : index
    %17 = vector.load %arg6[%c0_13, %c0_14] : memref<128x128xbf16, #tpu.memory_space<vmem>>, vector<128x128xbf16>
    %cst_15 = arith.constant dense<0.000000e+00> : vector<128x128xf32>
    %18 = tpu.matmul %16, %17, %cst_15 {dimension_numbers = #tpu.dot_dimension_numbers<[1], [0], [0], [1], [0, 0, 1, 1], [], []>} : vector<128x128xbf16>, vector<128x128xbf16>, vector<128x128xf32> -> vector<128x128xf32>
    %c0_16 = arith.constant 0 : index
    %c0_17 = arith.constant 0 : index
    %19 = vector.load %arg7[%c0_16, %c0_17] : memref<128x128xbf16, #tpu.memory_space<vmem>>, vector<128x128xbf16>
    %cst_18 = arith.constant dense<0.000000e+00> : vector<128x128xf32>
    %20 = tpu.matmul %14, %19, %cst_18 {dimension_numbers = #tpu.dot_dimension_numbers<[1], [0], [0], [1], [0, 0, 1, 1], [], []>} : vector<128x128xbf16>, vector<128x128xbf16>, vector<128x128xf32> -> vector<128x128xf32>
    %21 = arith.addf %18, %20 : vector<128x128xf32>
    %c0_19 = arith.constant 0 : index
    %c0_20 = arith.constant 0 : index
    %22 = vector.load %arg8[%c0_19, %c0_20] : memref<1x128xf32, #tpu.memory_space<vmem>>, vector<1x128xf32>
    %23 = vector.broadcast %22 : vector<1x128xf32> to vector<128x128xf32>
    %24 = arith.addf %21, %23 : vector<128x128xf32>
    %cst_21 = arith.constant 0.000000e+00 : f32
    %25 = vector.broadcast %cst_21 : f32 to vector<128x128xf32>
    %26 = arith.maximumf %24, %25 : vector<128x128xf32>
    %27 = arith.truncf %26 : vector<128x128xf32> to vector<128x128xbf16>
    %cst_22 = arith.constant dense<0.000000e+00> : vector<128x128xf32>
    %28 = tpu.matmul %0, %27, %cst_22 {dimension_numbers = #tpu.dot_dimension_numbers<[1], [0], [0], [1], [0, 0, 1, 1], [], []>} : vector<128x128xbf16>, vector<128x128xbf16>, vector<128x128xf32> -> vector<128x128xf32>
    %29 = arith.truncf %28 : vector<128x128xf32> to vector<128x128xbf16>
    %c0_23 = arith.constant 0 : index
    %c0_24 = arith.constant 0 : index
    %30 = vector.load %arg9[%c0_23, %c0_24] : memref<128x128xbf16, #tpu.memory_space<vmem>>, vector<128x128xbf16>
    %cst_25 = arith.constant dense<0.000000e+00> : vector<128x128xf32>
    %31 = tpu.matmul %29, %30, %cst_25 {dimension_numbers = #tpu.dot_dimension_numbers<[1], [0], [0], [1], [0, 0, 1, 1], [], []>} : vector<128x128xbf16>, vector<128x128xbf16>, vector<128x128xf32> -> vector<128x128xf32>
    %c0_26 = arith.constant 0 : index
    %c0_27 = arith.constant 0 : index
    %32 = vector.load %arg10[%c0_26, %c0_27] : memref<128x128xbf16, #tpu.memory_space<vmem>>, vector<128x128xbf16>
    %cst_28 = arith.constant dense<0.000000e+00> : vector<128x128xf32>
    %33 = tpu.matmul %27, %32, %cst_28 {dimension_numbers = #tpu.dot_dimension_numbers<[1], [0], [0], [1], [0, 0, 1, 1], [], []>} : vector<128x128xbf16>, vector<128x128xbf16>, vector<128x128xf32> -> vector<128x128xf32>
    %34 = arith.addf %31, %33 : vector<128x128xf32>
    %c0_29 = arith.constant 0 : index
    %c0_30 = arith.constant 0 : index
    %35 = vector.load %arg11[%c0_29, %c0_30] : memref<1x128xf32, #tpu.memory_space<vmem>>, vector<1x128xf32>
    %36 = vector.broadcast %35 : vector<1x128xf32> to vector<128x128xf32>
    %37 = arith.addf %34, %36 : vector<128x128xf32>
    %38 = arith.truncf %37 : vector<128x128xf32> to vector<128x128xbf16>
    %c0_31 = arith.constant 0 : index
    %c0_32 = arith.constant 0 : index
    %39 = vector.load %arg1[%c0_31, %c0_32] : memref<8x128xbf16, #tpu.memory_space<vmem>>, vector<8x128xbf16>
    %cst_33 = arith.constant dense<0.000000e+00> : vector<8x128xf32>
    %40 = tpu.matmul %39, %38, %cst_33 {dimension_numbers = #tpu.dot_dimension_numbers<[1], [0], [0], [1], [0, 0, 1, 1], [], []>} : vector<8x128xbf16>, vector<128x128xbf16>, vector<8x128xf32> -> vector<8x128xf32>
    %41 = arith.truncf %40 : vector<8x128xf32> to vector<8x128xbf16>
    %c0_34 = arith.constant 0 : index
    %c0_35 = arith.constant 0 : index
    %42 = vector.load %arg12[%c0_34, %c0_35] : memref<128x128xbf16, #tpu.memory_space<vmem>>, vector<128x128xbf16>
    %cst_36 = arith.constant dense<0.000000e+00> : vector<8x128xf32>
    %43 = tpu.matmul %41, %42, %cst_36 {dimension_numbers = #tpu.dot_dimension_numbers<[1], [0], [0], [1], [0, 0, 1, 1], [], []>} : vector<8x128xbf16>, vector<128x128xbf16>, vector<8x128xf32> -> vector<8x128xf32>
    %c0_37 = arith.constant 0 : index
    %c0_38 = arith.constant 0 : index
    %44 = vector.load %arg13[%c0_37, %c0_38] : memref<1x128xf32, #tpu.memory_space<vmem>>, vector<1x128xf32>
    %45 = vector.broadcast %44 : vector<1x128xf32> to vector<8x128xf32>
    %46 = arith.addf %43, %45 : vector<8x128xf32>
    %c0_39 = arith.constant 0 : index
    %c0_40 = arith.constant 0 : index
    %47 = vector.load %arg14[%c0_39, %c0_40] : memref<8x128xf32, #tpu.memory_space<vmem>>, vector<8x128xf32>
    tpu.vector_store %arg14[%c0_39, %c0_40], %46 {strides = array<i32>} : memref<8x128xf32, #tpu.memory_space<vmem>>, vector<8x128xf32>,
    return
  }
}

</mosaic_0001>

<llo_original>
// kernel: sage_forward.1
$region0: #{sage_forward.1}
  #allocation0 [shape = 'u32[]', space=smem, size = 0x4, offset = 0x4, fixed_abs, tag = 'smem constant byte address 0x4 - core index']
  #allocation1 [shape = 'u32[144,128]{1,0:T(1,128)}', space=vmem, size = 0x12000, scoped, tag = 'internal scratch']
  %s0 = inlined_call_operand.hbm [shape: bf16[128,128], index: 0, kind: input, shape index: {}]
  %s1 = inlined_call_operand.vmem [shape: bf16[8,128], index: 1, kind: input, shape index: {}]
  %s2 = inlined_call_operand.hbm [shape: bf16[128,128], index: 2, kind: input, shape index: {}]
  %s3 = inlined_call_operand.hbm [shape: bf16[128,128], index: 3, kind: input, shape index: {}]
  %s4 = inlined_call_operand.hbm [shape: bf16[128,128], index: 4, kind: input, shape index: {}]
  %s5 = inlined_call_operand.hbm [shape: f32[1,128], index: 5, kind: input, shape index: {}]
  %s6 = inlined_call_operand.hbm [shape: bf16[128,128], index: 6, kind: input, shape index: {}]
  %s7 = inlined_call_operand.hbm [shape: bf16[128,128], index: 7, kind: input, shape index: {}]
  %s8 = inlined_call_operand.vmem [shape: f32[1,128], index: 8, kind: input, shape index: {}]
  %s9 = inlined_call_operand.hbm [shape: bf16[128,128], index: 9, kind: input, shape index: {}]
  %s10 = inlined_call_operand.hbm [shape: bf16[128,128], index: 10, kind: input, shape index: {}]
  %s11 = inlined_call_operand.vmem [shape: f32[1,128], index: 11, kind: input, shape index: {}]
  %s12 = inlined_call_operand.hbm [shape: bf16[128,128], index: 12, kind: input, shape index: {}]
  %s13 = inlined_call_operand.vmem [shape: f32[1,128], index: 13, kind: input, shape index: {}]
  %s14 = inlined_call_operand.vmem [shape: f32[8,128], index: 14, kind: output, shape index: {}]
  %s15 = sld [smem:[#allocation0]]
  $region106: #{sage_forward.1} parent=0
    _
  %s17 = ssub.s32 1, %s15
  %s18 = scalar_select 0, %s17, %s15
  $region1: #{sage_forward.1} parent=0
    #allocation2 [shape = 'u8[32768]{0}', space=vmem, size = 0x8000, scoped, tag = 'input window, operand 0, single buffered']
    #allocation3 [shape = 's32[1]{0}', space=sflag, size = 0x4, scoped, tag = 'scoped memory for sage_forward.1']
    #allocation4 [shape = 'u8[32768]{0}', space=vmem, size = 0x8000, scoped, tag = 'input window, operand 2, single buffered']
    #allocation5 [shape = 's32[1]{0}', space=sflag, size = 0x4, scoped, tag = 'scoped memory for sage_forward.1']
    #allocation6 [shape = 'u8[32768]{0}', space=vmem, size = 0x8000, scoped, tag = 'input window, operand 3, single buffered']
    #allocation7 [shape = 'u8[32768]{0}', space=vmem, size = 0x8000, scoped, tag = 'input window, operand 4, single buffered']
    #allocation8 [shape = 's32[1]{0}', space=sflag, size = 0x4, scoped, tag = 'scoped memory for sage_forward.1']
    #allocation9 [shape = 'u8[512]{0}', space=vmem, size = 0x400, scoped, tag = 'input window, operand 5, single buffered']
    #allocation10 [shape = 'u8[32768]{0}', space=vmem, size = 0x8000, scoped, tag = 'input window, operand 6, single buffered']
    #allocation11 [shape = 's32[1]{0}', space=sflag, size = 0x4, scoped, tag = 'scoped memory for sage_forward.1']
    #allocation12 [shape = 'u8[32768]{0}', space=vmem, size = 0x8000, scoped, tag = 'input window, operand 7, single buffered']
    #allocation13 [shape = 'u8[32768]{0}', space=vmem, size = 0x8000, scoped, tag = 'input window, operand 9, single buffered']
    #allocation14 [shape = 's32[1]{0}', space=sflag, size = 0x4, scoped, tag = 'scoped memory for sage_forward.1']
    #allocation15 [shape = 'u8[32768]{0}', space=vmem, size = 0x8000, scoped, tag = 'input window, operand 10, single buffered']
    #allocation16 [shape = 'u8[32768]{0}', space=vmem, size = 0x8000, scoped, tag = 'input window, operand 12, single buffered']
    #allocation17 [shape = 's32[1]{0}', space=sflag, size = 0x4, scoped, tag = 'scoped memory for sage_forward.1']
    %19 = vsyncpa [#allocation3], 0
    %20 = vsyncpa [#allocation5], 0
    %21 = vsyncpa [#allocation8], 0
    %22 = vsyncpa [#allocation11], 0
    %23 = vsyncpa [#allocation14], 0
    %24 = vsyncpa [#allocation17], 0
    // Predicated region
    $region2: #{sage_forward.1} parent=1 // pred_check
      _
    $region3: #{sage_forward.1} parent=1 // pred_check_branch
      %26 = sbr.rel (0) target = $region5
    $region4: #{sage_forward.1} parent=1 // pred_region
      %s28 = ssub.s32 1024, 1024
      %29 = vsyncadd [#allocation3], %s28
      %s30 = sshll.u32 [#allocation2], 4
      %s31 = int_to_ptr.vmem [resolvable:$true] %s30
      %36 = dma.hbm_to_vmem [thread:$0]  %s0, 1024, %s31, [#allocation3], 64, 64, 4
    $region5: #{sage_forward.1} parent=1 // pred_fallthru
      _
    // Predicated region
    $region6: #{sage_forward.1} parent=1 // pred_check
      _
    $region7: #{sage_forward.1} parent=1 // pred_check_branch
      %38 = sbr.rel (0) target = $region9
    $region8: #{sage_forward.1} parent=1 // pred_region
      _
    $region9: #{sage_forward.1} parent=1 // pred_fallthru
      _
    // Predicated region
    $region10: #{sage_forward.1} parent=1 // pred_check
      _
    $region11: #{sage_forward.1} parent=1 // pred_check_branch
      %40 = sbr.rel (0) target = $region13
    $region12: #{sage_forward.1} parent=1 // pred_region
      %s42 = ssub.s32 1024, 1024
      %43 = vsyncadd [#allocation5], %s42
      %s44 = sshll.u32 [#allocation4], 4
      %s45 = int_to_ptr.vmem [resolvable:$true] %s44
      %50 = dma.hbm_to_vmem [thread:$0]  %s2, 1024, %s45, [#allocation5], 64, 64, 4
    $region13: #{sage_forward.1} parent=1 // pred_fallthru
      _
    // Predicated region
    $region14: #{sage_forward.1} parent=1 // pred_check
      _
    $region15: #{sage_forward.1} parent=1 // pred_check_branch
      %52 = sbr.rel (0) target = $region17
    $region16: #{sage_forward.1} parent=1 // pred_region
      %s54 = ssub.s32 1024, 1024
      %55 = vsyncadd [#allocation5], %s54
      %s56 = sshll.u32 [#allocation6], 4
      %s57 = int_to_ptr.vmem [resolvable:$true] %s56
      %62 = dma.hbm_to_vmem [thread:$0]  %s3, 1024, %s57, [#allocation5], 64, 64, 4
    $region17: #{sage_forward.1} parent=1 // pred_fallthru
      _
    // Predicated region
    $region18: #{sage_forward.1} parent=1 // pred_check
      _
    $region19: #{sage_forward.1} parent=1 // pred_check_branch
      %64 = sbr.rel (0) target = $region21
    $region20: #{sage_forward.1} parent=1 // pred_region
      %s66 = ssub.s32 1024, 1024
      %67 = vsyncadd [#allocation8], %s66
      %s68 = sshll.u32 [#allocation7], 4
      %s69 = int_to_ptr.vmem [resolvable:$true] %s68
      %74 = dma.hbm_to_vmem [thread:$0]  %s4, 1024, %s69, [#allocation8], 64, 64, 4
    $region21: #{sage_forward.1} parent=1 // pred_fallthru
      _
    // Predicated region
    $region22: #{sage_forward.1} parent=1 // pred_check
      _
    $region23: #{sage_forward.1} parent=1 // pred_check_branch
      %76 = sbr.rel (0) target = $region25
    $region24: #{sage_forward.1} parent=1 // pred_region
      %s78 = ssub.s32 16, 16
      %79 = vsyncadd [#allocation8], %s78
      %s81 = sshll.u32 [#allocation9], 4
      %s82 = int_to_ptr.vmem [resolvable:$true] %s81
      %84 = dma.hbm_to_vmem [thread:$0]  %s5, 16, %s82, [#allocation8]
    $region25: #{sage_forward.1} parent=1 // pred_fallthru
      _
    // Predicated region
    $region26: #{sage_forward.1} parent=1 // pred_check
      _
    $region27: #{sage_forward.1} parent=1 // pred_check_branch
      %86 = sbr.rel (0) target = $region29
    $region28: #{sage_forward.1} parent=1 // pred_region
      %s88 = ssub.s32 1024, 1024
      %89 = vsyncadd [#allocation11], %s88
      %s90 = sshll.u32 [#allocation10], 4
      %s91 = int_to_ptr.vmem [resolvable:$true] %s90
      %96 = dma.hbm_to_vmem [thread:$0]  %s6, 1024, %s91, [#allocation11], 64, 64, 4
    $region29: #{sage_forward.1} parent=1 // pred_fallthru
      _
    // Predicated region
    $region30: #{sage_forward.1} parent=1 // pred_check
      _
    $region31: #{sage_forward.1} parent=1 // pred_check_branch
      %98 = sbr.rel (0) target = $region33
    $region32: #{sage_forward.1} parent=1 // pred_region
      %s100 = ssub.s32 1024, 1024
      %101 = vsyncadd [#allocation11], %s100
      %s102 = sshll.u32 [#allocation12], 4
      %s103 = int_to_ptr.vmem [resolvable:$true] %s102
      %108 = dma.hbm_to_vmem [thread:$0]  %s7, 1024, %s103, [#allocation11], 64, 64, 4
    $region33: #{sage_forward.1} parent=1 // pred_fallthru
      _
    // Predicated region
    $region34: #{sage_forward.1} parent=1 // pred_check
      _
    $region35: #{sage_forward.1} parent=1 // pred_check_branch
      %110 = sbr.rel (0) target = $region37
    $region36: #{sage_forward.1} parent=1 // pred_region
      _
    $region37: #{sage_forward.1} parent=1 // pred_fallthru
      _
    // Predicated region
    $region38: #{sage_forward.1} parent=1 // pred_check
      _
    $region39: #{sage_forward.1} parent=1 // pred_check_branch
      %112 = sbr.rel (0) target = $region41
    $region40: #{sage_forward.1} parent=1 // pred_region
      %s114 = ssub.s32 1024, 1024
      %115 = vsyncadd [#allocation14], %s114
      %s116 = sshll.u32 [#allocation13], 4
      %s117 = int_to_ptr.vmem [resolvable:$true] %s116
      %122 = dma.hbm_to_vmem [thread:$0]  %s9, 1024, %s117, [#allocation14], 64, 64, 4
    $region41: #{sage_forward.1} parent=1 // pred_fallthru
      _
    // Predicated region
    $region42: #{sage_forward.1} parent=1 // pred_check
      _
    $region43: #{sage_forward.1} parent=1 // pred_check_branch
      %124 = sbr.rel (0) target = $region45
    $region44: #{sage_forward.1} parent=1 // pred_region
      %s126 = ssub.s32 1024, 1024
      %127 = vsyncadd [#allocation14], %s126
      %s128 = sshll.u32 [#allocation15], 4
      %s129 = int_to_ptr.vmem [resolvable:$true] %s128
      %134 = dma.hbm_to_vmem [thread:$0]  %s10, 1024, %s129, [#allocation14], 64, 64, 4
    $region45: #{sage_forward.1} parent=1 // pred_fallthru
      _
    // Predicated region
    $region46: #{sage_forward.1} parent=1 // pred_check
      _
    $region47: #{sage_forward.1} parent=1 // pred_check_branch
      %136 = sbr.rel (0) target = $region49
    $region48: #{sage_forward.1} parent=1 // pred_region
      _
    $region49: #{sage_forward.1} parent=1 // pred_fallthru
      _
    // Predicated region
    $region50: #{sage_forward.1} parent=1 // pred_check
      _
    $region51: #{sage_forward.1} parent=1 // pred_check_branch
      %138 = sbr.rel (0) target = $region53
    $region52: #{sage_forward.1} parent=1 // pred_region
      %s140 = ssub.s32 1024, 1024
      %141 = vsyncadd [#allocation17], %s140
      %s142 = sshll.u32 [#allocation16], 4
      %s143 = int_to_ptr.vmem [resolvable:$true] %s142
      %148 = dma.hbm_to_vmem [thread:$0]  %s12, 1024, %s143, [#allocation17], 64, 64, 4
    $region53: #{sage_forward.1} parent=1 // pred_fallthru
      _
    // Predicated region
    $region54: #{sage_forward.1} parent=1 // pred_check
      _
    $region55: #{sage_forward.1} parent=1 // pred_check_branch
      %150 = sbr.rel (0) target = $region57
    $region56: #{sage_forward.1} parent=1 // pred_region
      _
    $region57: #{sage_forward.1} parent=1 // pred_fallthru
      _
    // Predicated region
    $region58: #{sage_forward.1} parent=1 // pred_check
      _
    $region59: #{sage_forward.1} parent=1 // pred_check_branch
      %152 = sbr.rel (0) target = $region61
    $region60: #{sage_forward.1} parent=1 // pred_region
      %153 = dma.done [#allocation3], 1024
    $region61: #{sage_forward.1} parent=1 // pred_fallthru
      _
    // Predicated region
    $region62: #{sage_forward.1} parent=1 // pred_check
      _
    $region63: #{sage_forward.1} parent=1 // pred_check_branch
      %155 = sbr.rel (0) target = $region65
    $region64: #{sage_forward.1} parent=1 // pred_region
      %156 = dma.done [#allocation5], 1024
    $region65: #{sage_forward.1} parent=1 // pred_fallthru
      _
    // Predicated region
    $region66: #{sage_forward.1} parent=1 // pred_check
      _
    $region67: #{sage_forward.1} parent=1 // pred_check_branch
      %158 = sbr.rel (0) target = $region69
    $region68: #{sage_forward.1} parent=1 // pred_region
      %159 = dma.done [#allocation5], 1024
    $region69: #{sage_forward.1} parent=1 // pred_fallthru
      _
    // Predicated region
    $region70: #{sage_forward.1} parent=1 // pred_check
      _
    $region71: #{sage_forward.1} parent=1 // pred_check_branch
      %161 = sbr.rel (0) target = $region73
    $region72: #{sage_forward.1} parent=1 // pred_region
      %162 = dma.done [#allocation8], 1024
    $region73: #{sage_forward.1} parent=1 // pred_fallthru
      _
    // Predicated region
    $region74: #{sage_forward.1} parent=1 // pred_check
      _
    $region75: #{sage_forward.1} parent=1 // pred_check_branch
      %164 = sbr.rel (0) target = $region77
    $region76: #{sage_forward.1} parent=1 // pred_region
      %165 = dma.done [#allocation8], 16
    $region77: #{sage_forward.1} parent=1 // pred_fallthru
      _
    // Predicated region
    $region78: #{sage_forward.1} parent=1 // pred_check
      _
    $region79: #{sage_forward.1} parent=1 // pred_check_branch
      %167 = sbr.rel (0) target = $region81
    $region80: #{sage_forward.1} parent=1 // pred_region
      %168 = dma.done [#allocation11], 1024
    $region81: #{sage_forward.1} parent=1 // pred_fallthru
      _
    // Predicated region
    $region82: #{sage_forward.1} parent=1 // pred_check
      _
    $region83: #{sage_forward.1} parent=1 // pred_check_branch
      %170 = sbr.rel (0) target = $region85
    $region84: #{sage_forward.1} parent=1 // pred_region
      %171 = dma.done [#allocation11], 1024
    $region85: #{sage_forward.1} parent=1 // pred_fallthru
      _
    // Predicated region
    $region86: #{sage_forward.1} parent=1 // pred_check
      _
    $region87: #{sage_forward.1} parent=1 // pred_check_branch
      %173 = sbr.rel (0) target = $region89
    $region88: #{sage_forward.1} parent=1 // pred_region
      %174 = dma.done [#allocation14], 1024
    $region89: #{sage_forward.1} parent=1 // pred_fallthru
      _
    // Predicated region
    $region90: #{sage_forward.1} parent=1 // pred_check
      _
    $region91: #{sage_forward.1} parent=1 // pred_check_branch
      %176 = sbr.rel (0) target = $region93
    $region92: #{sage_forward.1} parent=1 // pred_region
      %177 = dma.done [#allocation14], 1024
    $region93: #{sage_forward.1} parent=1 // pred_fallthru
      _
    // Predicated region
    $region94: #{sage_forward.1} parent=1 // pred_check
      _
    $region95: #{sage_forward.1} parent=1 // pred_check_branch
      %179 = sbr.rel (0) target = $region97
    $region96: #{sage_forward.1} parent=1 // pred_region
      %180 = dma.done [#allocation17], 1024
    $region97: #{sage_forward.1} parent=1 // pred_fallthru
      _
    %v182 = vld [vmem:[#allocation2] sm:$0xf]
    %v183 = vld [vmem:[#allocation2 + $0x4] sm:$0xf]
    %v184 = vld [vmem:[#allocation2 + $0x8] sm:$0xf]
    %v185 = vld [vmem:[#allocation2 + $0xc] sm:$0xf]
    %v186 = vld [vmem:[#allocation2 + $0x10] sm:$0xf]
    %v187 = vld [vmem:[#allocation2 + $0x14] sm:$0xf]
    %v188 = vld [vmem:[#allocation2 + $0x18] sm:$0xf]
    %v189 = vld [vmem:[#allocation2 + $0x1c] sm:$0xf]
    %v190 = vld [vmem:[#allocation2 + $0x20] sm:$0xf]
    %v191 = vld [vmem:[#allocation2 + $0x24] sm:$0xf]
    %v192 = vld [vmem:[#allocation2 + $0x28] sm:$0xf]
    %v193 = vld [vmem:[#allocation2 + $0x2c] sm:$0xf]
    %v194 = vld [vmem:[#allocation2 + $0x30] sm:$0xf]
    %v195 = vld [vmem:[#allocation2 + $0x34] sm:$0xf]
    %v196 = vld [vmem:[#allocation2 + $0x38] sm:$0xf]
    %v197 = vld [vmem:[#allocation2 + $0x3c] sm:$0xf]
    %v198 = vld [vmem:[#allocation4] sm:$0xf]
    %v199 = vld [vmem:[#allocation4 + $0x4] sm:$0xf]
    %v200 = vld [vmem:[#allocation4 + $0x8] sm:$0xf]
    %v201 = vld [vmem:[#allocation4 + $0xc] sm:$0xf]
    %v202 = vld [vmem:[#allocation4 + $0x10] sm:$0xf]
    %v203 = vld [vmem:[#allocation4 + $0x14] sm:$0xf]
    %v204 = vld [vmem:[#allocation4 + $0x18] sm:$0xf]
    %v205 = vld [vmem:[#allocation4 + $0x1c] sm:$0xf]
    %v206 = vld [vmem:[#allocation4 + $0x20] sm:$0xf]
    %v207 = vld [vmem:[#allocation4 + $0x24] sm:$0xf]
    %v208 = vld [vmem:[#allocation4 + $0x28] sm:$0xf]
    %v209 = vld [vmem:[#allocation4 + $0x2c] sm:$0xf]
    %v210 = vld [vmem:[#allocation4 + $0x30] sm:$0xf]
    %v211 = vld [vmem:[#allocation4 + $0x34] sm:$0xf]
    %v212 = vld [vmem:[#allocation4 + $0x38] sm:$0xf]
    %v213 = vld [vmem:[#allocation4 + $0x3c] sm:$0xf]
    %v230 = vunpack.c.l.b16 %v182
    %v231 = vunpack.c.l.b16 %v183
    %v232 = vunpack.c.l.b16 %v184
    %v233 = vunpack.c.l.b16 %v185
    %v234 = vunpack.c.l.b16 %v186
    %v235 = vunpack.c.l.b16 %v187
    %v236 = vunpack.c.l.b16 %v188
    %v237 = vunpack.c.l.b16 %v189
    %v238 = vunpack.c.l.b16 %v190
    %v239 = vunpack.c.l.b16 %v191
    %v240 = vunpack.c.l.b16 %v192
    %v241 = vunpack.c.l.b16 %v193
    %v242 = vunpack.c.l.b16 %v194
    %v243 = vunpack.c.l.b16 %v195
    %v244 = vunpack.c.l.b16 %v196
    %v245 = vunpack.c.l.b16 %v197
    %v246 = vpack.c.b16 %v231, %v230
    %v247 = vpack.c.b16 %v233, %v232
    %v248 = vpack.c.b16 %v235, %v234
    %v249 = vpack.c.b16 %v237, %v236
    %v250 = vpack.c.b16 %v239, %v238
    %v251 = vpack.c.b16 %v241, %v240
    %v252 = vpack.c.b16 %v243, %v242
    %v253 = vpack.c.b16 %v245, %v244
    %v278 = vunpack.c.l.b16 %v198
    %v279 = vunpack.c.l.b16 %v199
    %v280 = vunpack.c.l.b16 %v200
    %v281 = vunpack.c.l.b16 %v201
    %v282 = vunpack.c.l.b16 %v202
    %v283 = vunpack.c.l.b16 %v203
    %v284 = vunpack.c.l.b16 %v204
    %v285 = vunpack.c.l.b16 %v205
    %v286 = vunpack.c.l.b16 %v206
    %v287 = vunpack.c.l.b16 %v207
    %v288 = vunpack.c.l.b16 %v208
    %v289 = vunpack.c.l.b16 %v209
    %v290 = vunpack.c.l.b16 %v210
    %v291 = vunpack.c.l.b16 %v211
    %v292 = vunpack.c.l.b16 %v212
    %v293 = vunpack.c.l.b16 %v213
    %v294 = vpack.c.b16 %v279, %v278
    %v295 = vpack.c.b16 %v281, %v280
    %v296 = vpack.c.b16 %v283, %v282
    %v297 = vpack.c.b16 %v285, %v284
    %v298 = vpack.c.b16 %v287, %v286
    %v299 = vpack.c.b16 %v289, %v288
    %v300 = vpack.c.b16 %v291, %v290
    %v301 = vpack.c.b16 %v293, %v292
    %310 = vmatprep.subr.bf16.mxu0 0
    %311 = vmatpush1.bf16.msra.mxu0 %v301
    %312 = vmatprep.subr.bf16.mxu0 0
    %313 = vmatpush1.bf16.msra.mxu0 %v300
    %314 = vmatprep.subr.bf16.mxu0 0
    %315 = vmatpush1.bf16.msra.mxu0 %v299
    %316 = vmatprep.subr.bf16.mxu0 0
    %317 = vmatpush1.bf16.msra.mxu0 %v298
    %318 = vmatprep.subr.bf16.mxu0 0
    %319 = vmatpush1.bf16.msra.mxu0 %v297
    %320 = vmatprep.subr.bf16.mxu0 0
    %321 = vmatpush1.bf16.msra.mxu0 %v296
    %322 = vmatprep.subr.bf16.mxu0 0
    %323 = vmatpush1.bf16.msra.mxu0 %v295
    %324 = vmatprep.subr.bf16.mxu0 0
    %325 = vmatpush1.bf16.msra.mxu0 %v294
    %326 = vmatprep.subr.bf16.mxu0 0
    %327 = vmatpush2.bf16.msra.mxu0 0
    %328 = vmatprep.subr.bf16.mxu0 0
    %329 = vmatpush2.bf16.msra.mxu0 0
    %330 = vmatprep.subr.bf16.mxu0 0
    %331 = vmatpush2.bf16.msra.mxu0 0
    %332 = vmatprep.subr.bf16.mxu0 0
    %333 = vmatpush2.bf16.msra.mxu0 0
    %334 = vmatprep.subr.bf16.mxu0 0
    %335 = vmatpush2.bf16.msra.mxu0 0
    %336 = vmatprep.subr.bf16.mxu0 0
    %337 = vmatpush2.bf16.msra.mxu0 0
    %338 = vmatprep.subr.bf16.mxu0 0
    %339 = vmatpush2.bf16.msra.mxu0 0
    %340 = vmatprep.subr.bf16.mxu0 0
    %341 = vmatpush2.bf16.msra.mxu0 0
    %342 = vmatprep.mubr.bf16.mxu0 0
    %343 = vmatmul.mubr.bf16.gmra.mxu0 %v246
    %v344 = vpop.f32.mrf.mxu0
    %v345 = vadd.f32 0.0, %v344
    %v346 = vpop.f32.mrf.mxu0
    %v347 = vpop.f32.mrf.mxu0
    %v348 = vadd.f32 0.0, %v347
    %v349 = vpop.f32.mrf.mxu0
    %350 = vmatprep.mubr.bf16.mxu0 0
    %351 = vmatmul.mubr.bf16.gmra.mxu0 %v247
    %v352 = vpop.f32.mrf.mxu0
    %v353 = vadd.f32 0.0, %v352
    %v354 = vpop.f32.mrf.mxu0
    %v355 = vpop.f32.mrf.mxu0
    %v356 = vadd.f32 0.0, %v355
    %v357 = vpop.f32.mrf.mxu0
    %358 = vmatprep.mubr.bf16.mxu0 0
    %359 = vmatmul.mubr.bf16.gmra.mxu0 %v248
    %v360 = vpop.f32.mrf.mxu0
    %v361 = vadd.f32 0.0, %v360
    %v362 = vpop.f32.mrf.mxu0
    %v363 = vpop.f32.mrf.mxu0
    %v364 = vadd.f32 0.0, %v363
    %v365 = vpop.f32.mrf.mxu0
    %366 = vmatprep.mubr.bf16.mxu0 0
    %367 = vmatmul.mubr.bf16.gmra.mxu0 %v249
    %v368 = vpop.f32.mrf.mxu0
    %v369 = vadd.f32 0.0, %v368
    %v370 = vpop.f32.mrf.mxu0
    %v371 = vpop.f32.mrf.mxu0
    %v372 = vadd.f32 0.0, %v371
    %v373 = vpop.f32.mrf.mxu0
    %374 = vmatprep.mubr.bf16.mxu0 0
    %375 = vmatmul.mubr.bf16.gmra.mxu0 %v250
    %v376 = vpop.f32.mrf.mxu0
    %v377 = vadd.f32 0.0, %v376
    %v378 = vpop.f32.mrf.mxu0
    %v379 = vpop.f32.mrf.mxu0
    %v380 = vadd.f32 0.0, %v379
    %v381 = vpop.f32.mrf.mxu0
    %382 = vmatprep.mubr.bf16.mxu0 0
    %383 = vmatmul.mubr.bf16.gmra.mxu0 %v251
    %v384 = vpop.f32.mrf.mxu0
    %v385 = vadd.f32 0.0, %v384
    %v386 = vpop.f32.mrf.mxu0
    %v387 = vpop.f32.mrf.mxu0
    %v388 = vadd.f32 0.0, %v387
    %v389 = vpop.f32.mrf.mxu0
    %390 = vmatprep.mubr.bf16.mxu0 0
    %391 = vmatmul.mubr.bf16.gmra.mxu0 %v252
    %v392 = vpop.f32.mrf.mxu0
    %v393 = vadd.f32 0.0, %v392
    %v394 = vpop.f32.mrf.mxu0
    %v395 = vpop.f32.mrf.mxu0
    %v396 = vadd.f32 0.0, %v395
    %v397 = vpop.f32.mrf.mxu0
    %398 = vmatprep.mubr.bf16.mxu0 0
    %399 = vmatmul.mubr.bf16.gmra.mxu0 %v253
    %v400 = vpop.f32.mrf.mxu0
    %v401 = vadd.f32 0.0, %v400
    %v402 = vpop.f32.mrf.mxu0
    %v403 = vpop.f32.mrf.mxu0
    %v404 = vadd.f32 0.0, %v403
    %v405 = vpop.f32.mrf.mxu0
    %406 = vdwg.mxu0
    %v407 = vpack.c.bf16 %v348, %v345
    %v408 = vpack.c.bf16 %v356, %v353
    %v409 = vpack.c.bf16 %v364, %v361
    %v410 = vpack.c.bf16 %v372, %v369
    %v411 = vpack.c.bf16 %v380, %v377
    %v412 = vpack.c.bf16 %v388, %v385
    %v413 = vpack.c.bf16 %v396, %v393
    %v414 = vpack.c.bf16 %v404, %v401
    %v415 = vld [vmem:[#allocation6] sm:$0xf]
    %v416 = vld [vmem:[#allocation6 + $0x4] sm:$0xf]
    %v417 = vld [vmem:[#allocation6 + $0x8] sm:$0xf]
    %v418 = vld [vmem:[#allocation6 + $0xc] sm:$0xf]
    %v419 = vld [vmem:[#allocation6 + $0x10] sm:$0xf]
    %v420 = vld [vmem:[#allocation6 + $0x14] sm:$0xf]
    %v421 = vld [vmem:[#allocation6 + $0x18] sm:$0xf]
    %v422 = vld [vmem:[#allocation6 + $0x1c] sm:$0xf]
    %v423 = vld [vmem:[#allocation6 + $0x20] sm:$0xf]
    %v424 = vld [vmem:[#allocation6 + $0x24] sm:$0xf]
    %v425 = vld [vmem:[#allocation6 + $0x28] sm:$0xf]
    %v426 = vld [vmem:[#allocation6 + $0x2c] sm:$0xf]
    %v427 = vld [vmem:[#allocation6 + $0x30] sm:$0xf]
    %v428 = vld [vmem:[#allocation6 + $0x34] sm:$0xf]
    %v429 = vld [vmem:[#allocation6 + $0x38] sm:$0xf]
    %v430 = vld [vmem:[#allocation6 + $0x3c] sm:$0xf]
    %v431 = vld [vmem:[#allocation7] sm:$0xf]
    %v432 = vld [vmem:[#allocation7 + $0x4] sm:$0xf]
    %v433 = vld [vmem:[#allocation7 + $0x8] sm:$0xf]
    %v434 = vld [vmem:[#allocation7 + $0xc] sm:$0xf]
    %v435 = vld [vmem:[#allocation7 + $0x10] sm:$0xf]
    %v436 = vld [vmem:[#allocation7 + $0x14] sm:$0xf]
    %v437 = vld [vmem:[#allocation7 + $0x18] sm:$0xf]
    %v438 = vld [vmem:[#allocation7 + $0x1c] sm:$0xf]
    %v439 = vld [vmem:[#allocation7 + $0x20] sm:$0xf]
    %v440 = vld [vmem:[#allocation7 + $0x24] sm:$0xf]
    %v441 = vld [vmem:[#allocation7 + $0x28] sm:$0xf]
    %v442 = vld [vmem:[#allocation7 + $0x2c] sm:$0xf]
    %v443 = vld [vmem:[#allocation7 + $0x30] sm:$0xf]
    %v444 = vld [vmem:[#allocation7 + $0x34] sm:$0xf]
    %v445 = vld [vmem:[#allocation7 + $0x38] sm:$0xf]
    %v446 = vld [vmem:[#allocation7 + $0x3c] sm:$0xf]
    %v463 = vunpack.c.l.b16 %v431
    %v464 = vunpack.c.l.b16 %v432
    %v465 = vunpack.c.l.b16 %v433
    %v466 = vunpack.c.l.b16 %v434
    %v467 = vunpack.c.l.b16 %v435
    %v468 = vunpack.c.l.b16 %v436
    %v469 = vunpack.c.l.b16 %v437
    %v470 = vunpack.c.l.b16 %v438
    %v471 = vunpack.c.l.b16 %v439
    %v472 = vunpack.c.l.b16 %v440
    %v473 = vunpack.c.l.b16 %v441
    %v474 = vunpack.c.l.b16 %v442
    %v475 = vunpack.c.l.b16 %v443
    %v476 = vunpack.c.l.b16 %v444
    %v477 = vunpack.c.l.b16 %v445
    %v478 = vunpack.c.l.b16 %v446
    %v479 = vpack.c.b16 %v464, %v463
    %v480 = vpack.c.b16 %v466, %v465
    %v481 = vpack.c.b16 %v468, %v467
    %v482 = vpack.c.b16 %v470, %v469
    %v483 = vpack.c.b16 %v472, %v471
    %v484 = vpack.c.b16 %v474, %v473
    %v485 = vpack.c.b16 %v476, %v475
    %v486 = vpack.c.b16 %v478, %v477
    %495 = vmatprep.subr.bf16.mxu0 0
    %496 = vmatpush1.bf16.msra.mxu0 %v486
    %497 = vmatprep.subr.bf16.mxu0 0
    %498 = vmatpush1.bf16.msra.mxu0 %v485
    %499 = vmatprep.subr.bf16.mxu0 0
    %500 = vmatpush1.bf16.msra.mxu0 %v484
    %501 = vmatprep.subr.bf16.mxu0 0
    %502 = vmatpush1.bf16.msra.mxu0 %v483
    %503 = vmatprep.subr.bf16.mxu0 0
    %504 = vmatpush1.bf16.msra.mxu0 %v482
    %505 = vmatprep.subr.bf16.mxu0 0
    %506 = vmatpush1.bf16.msra.mxu0 %v481
    %507 = vmatprep.subr.bf16.mxu0 0
    %508 = vmatpush1.bf16.msra.mxu0 %v480
    %509 = vmatprep.subr.bf16.mxu0 0
    %510 = vmatpush1.bf16.msra.mxu0 %v479
    %511 = vmatprep.subr.bf16.mxu0 0
    %512 = vmatpush2.bf16.msra.mxu0 0
    %513 = vmatprep.subr.bf16.mxu0 0
    %514 = vmatpush2.bf16.msra.mxu0 0
    %515 = vmatprep.subr.bf16.mxu0 0
    %516 = vmatpush2.bf16.msra.mxu0 0
    %517 = vmatprep.subr.bf16.mxu0 0
    %518 = vmatpush2.bf16.msra.mxu0 0
    %519 = vmatprep.subr.bf16.mxu0 0
    %520 = vmatpush2.bf16.msra.mxu0 0
    %521 = vmatprep.subr.bf16.mxu0 0
    %522 = vmatpush2.bf16.msra.mxu0 0
    %523 = vmatprep.subr.bf16.mxu0 0
    %524 = vmatpush2.bf16.msra.mxu0 0
    %525 = vmatprep.subr.bf16.mxu0 0
    %526 = vmatpush2.bf16.msra.mxu0 0
    %527 = vmatprep.mubr.bf16.mxu0 0
    %528 = vmatmul.mubr.bf16.gmra.mxu0 %v294
    %v529 = vpop.f32.mrf.mxu0
    %v530 = vadd.f32 0.0, %v529
    %v531 = vpop.f32.mrf.mxu0
    %v532 = vpop.f32.mrf.mxu0
    %v533 = vadd.f32 0.0, %v532
    %v534 = vpop.f32.mrf.mxu0
    %535 = vmatprep.mubr.bf16.mxu0 0
    %536 = vmatmul.mubr.bf16.gmra.mxu0 %v295
    %v537 = vpop.f32.mrf.mxu0
    %v538 = vadd.f32 0.0, %v537
    %v539 = vpop.f32.mrf.mxu0
    %v540 = vpop.f32.mrf.mxu0
    %v541 = vadd.f32 0.0, %v540
    %v542 = vpop.f32.mrf.mxu0
    %543 = vmatprep.mubr.bf16.mxu0 0
    %544 = vmatmul.mubr.bf16.gmra.mxu0 %v296
    %v545 = vpop.f32.mrf.mxu0
    %v546 = vadd.f32 0.0, %v545
    %v547 = vpop.f32.mrf.mxu0
    %v548 = vpop.f32.mrf.mxu0
    %v549 = vadd.f32 0.0, %v548
    %v550 = vpop.f32.mrf.mxu0
    %551 = vmatprep.mubr.bf16.mxu0 0
    %552 = vmatmul.mubr.bf16.gmra.mxu0 %v297
    %v553 = vpop.f32.mrf.mxu0
    %v554 = vadd.f32 0.0, %v553
    %v555 = vpop.f32.mrf.mxu0
    %v556 = vpop.f32.mrf.mxu0
    %v557 = vadd.f32 0.0, %v556
    %v558 = vpop.f32.mrf.mxu0
    %559 = vmatprep.mubr.bf16.mxu0 0
    %560 = vmatmul.mubr.bf16.gmra.mxu0 %v298
    %v561 = vpop.f32.mrf.mxu0
    %v562 = vadd.f32 0.0, %v561
    %v563 = vpop.f32.mrf.mxu0
    %v564 = vpop.f32.mrf.mxu0
    %v565 = vadd.f32 0.0, %v564
    %v566 = vpop.f32.mrf.mxu0
    %567 = vmatprep.mubr.bf16.mxu0 0
    %568 = vmatmul.mubr.bf16.gmra.mxu0 %v299
    %v569 = vpop.f32.mrf.mxu0
    %v570 = vadd.f32 0.0, %v569
    %v571 = vpop.f32.mrf.mxu0
    %v572 = vpop.f32.mrf.mxu0
    %v573 = vadd.f32 0.0, %v572
    %v574 = vpop.f32.mrf.mxu0
    %575 = vmatprep.mubr.bf16.mxu0 0
    %576 = vmatmul.mubr.bf16.gmra.mxu0 %v300
    %v577 = vpop.f32.mrf.mxu0
    %v578 = vadd.f32 0.0, %v577
    %v579 = vpop.f32.mrf.mxu0
    %v580 = vpop.f32.mrf.mxu0
    %v581 = vadd.f32 0.0, %v580
    %v582 = vpop.f32.mrf.mxu0
    %583 = vmatprep.mubr.bf16.mxu0 0
    %584 = vmatmul.mubr.bf16.gmra.mxu0 %v301
    %v585 = vpop.f32.mrf.mxu0
    %v586 = vadd.f32 0.0, %v585
    %v587 = vpop.f32.mrf.mxu0
    %v588 = vpop.f32.mrf.mxu0
    %v589 = vadd.f32 0.0, %v588
    %v590 = vpop.f32.mrf.mxu0
    %591 = vdwg.mxu0
    %v608 = vunpack.c.l.b16 %v415
    %v609 = vunpack.c.l.b16 %v416
    %v610 = vunpack.c.l.b16 %v417
    %v611 = vunpack.c.l.b16 %v418
    %v612 = vunpack.c.l.b16 %v419
    %v613 = vunpack.c.l.b16 %v420
    %v614 = vunpack.c.l.b16 %v421
    %v615 = vunpack.c.l.b16 %v422
    %v616 = vunpack.c.l.b16 %v423
    %v617 = vunpack.c.l.b16 %v424
    %v618 = vunpack.c.l.b16 %v425
    %v619 = vunpack.c.l.b16 %v426
    %v620 = vunpack.c.l.b16 %v427
    %v621 = vunpack.c.l.b16 %v428
    %v622 = vunpack.c.l.b16 %v429
    %v623 = vunpack.c.l.b16 %v430
    %v624 = vpack.c.b16 %v609, %v608
    %v625 = vpack.c.b16 %v611, %v610
    %v626 = vpack.c.b16 %v613, %v612
    %v627 = vpack.c.b16 %v615, %v614
    %v628 = vpack.c.b16 %v617, %v616
    %v629 = vpack.c.b16 %v619, %v618
    %v630 = vpack.c.b16 %v621, %v620
    %v631 = vpack.c.b16 %v623, %v622
    %640 = vmatprep.subr.bf16.mxu0 0
    %641 = vmatpush1.bf16.msra.mxu0 %v631
    %642 = vmatprep.subr.bf16.mxu0 0
    %643 = vmatpush1.bf16.msra.mxu0 %v630
    %644 = vmatprep.subr.bf16.mxu0 0
    %645 = vmatpush1.bf16.msra.mxu0 %v629
    %646 = vmatprep.subr.bf16.mxu0 0
    %647 = vmatpush1.bf16.msra.mxu0 %v628
    %648 = vmatprep.subr.bf16.mxu0 0
    %649 = vmatpush1.bf16.msra.mxu0 %v627
    %650 = vmatprep.subr.bf16.mxu0 0
    %651 = vmatpush1.bf16.msra.mxu0 %v626
    %652 = vmatprep.subr.bf16.mxu0 0
    %653 = vmatpush1.bf16.msra.mxu0 %v625
    %654 = vmatprep.subr.bf16.mxu0 0
    %655 = vmatpush1.bf16.msra.mxu0 %v624
    %656 = vmatprep.subr.bf16.mxu0 0
    %657 = vmatpush2.bf16.msra.mxu0 0
    %658 = vmatprep.subr.bf16.mxu0 0
    %659 = vmatpush2.bf16.msra.mxu0 0
    %660 = vmatprep.subr.bf16.mxu0 0
    %661 = vmatpush2.bf16.msra.mxu0 0
    %662 = vmatprep.subr.bf16.mxu0 0
    %663 = vmatpush2.bf16.msra.mxu0 0
    %664 = vmatprep.subr.bf16.mxu0 0
    %665 = vmatpush2.bf16.msra.mxu0 0
    %666 = vmatprep.subr.bf16.mxu0 0
    %667 = vmatpush2.bf16.msra.mxu0 0
    %668 = vmatprep.subr.bf16.mxu0 0
    %669 = vmatpush2.bf16.msra.mxu0 0
    %670 = vmatprep.subr.bf16.mxu0 0
    %671 = vmatpush2.bf16.msra.mxu0 0
    %672 = vmatprep.mubr.bf16.mxu0 0
    %673 = vmatmul.mubr.bf16.gmra.mxu0 %v407
    %v674 = vpop.f32.mrf.mxu0
    %v675 = vadd.f32 %v530, %v674
    %v676 = vpop.f32.mrf.mxu0
    %v677 = vpop.f32.mrf.mxu0
    %v678 = vadd.f32 %v533, %v677
    %v679 = vpop.f32.mrf.mxu0
    %680 = vmatprep.mubr.bf16.mxu0 0
    %681 = vmatmul.mubr.bf16.gmra.mxu0 %v408
    %v682 = vpop.f32.mrf.mxu0
    %v683 = vadd.f32 %v538, %v682
    %v684 = vpop.f32.mrf.mxu0
    %v685 = vpop.f32.mrf.mxu0
    %v686 = vadd.f32 %v541, %v685
    %v687 = vpop.f32.mrf.mxu0
    %688 = vmatprep.mubr.bf16.mxu0 0
    %689 = vmatmul.mubr.bf16.gmra.mxu0 %v409
    %v690 = vpop.f32.mrf.mxu0
    %v691 = vadd.f32 %v546, %v690
    %v692 = vpop.f32.mrf.mxu0
    %v693 = vpop.f32.mrf.mxu0
    %v694 = vadd.f32 %v549, %v693
    %v695 = vpop.f32.mrf.mxu0
    %696 = vmatprep.mubr.bf16.mxu0 0
    %697 = vmatmul.mubr.bf16.gmra.mxu0 %v410
    %v698 = vpop.f32.mrf.mxu0
    %v699 = vadd.f32 %v554, %v698
    %v700 = vpop.f32.mrf.mxu0
    %v701 = vpop.f32.mrf.mxu0
    %v702 = vadd.f32 %v557, %v701
    %v703 = vpop.f32.mrf.mxu0
    %704 = vmatprep.mubr.bf16.mxu0 0
    %705 = vmatmul.mubr.bf16.gmra.mxu0 %v411
    %v706 = vpop.f32.mrf.mxu0
    %v707 = vadd.f32 %v562, %v706
    %v708 = vpop.f32.mrf.mxu0
    %v709 = vpop.f32.mrf.mxu0
    %v710 = vadd.f32 %v565, %v709
    %v711 = vpop.f32.mrf.mxu0
    %712 = vmatprep.mubr.bf16.mxu0 0
    %713 = vmatmul.mubr.bf16.gmra.mxu0 %v412
    %v714 = vpop.f32.mrf.mxu0
    %v715 = vadd.f32 %v570, %v714
    %v716 = vpop.f32.mrf.mxu0
    %v717 = vpop.f32.mrf.mxu0
    %v718 = vadd.f32 %v573, %v717
    %v719 = vpop.f32.mrf.mxu0
    %720 = vmatprep.mubr.bf16.mxu0 0
    %721 = vmatmul.mubr.bf16.gmra.mxu0 %v413
    %v722 = vpop.f32.mrf.mxu0
    %v723 = vadd.f32 %v578, %v722
    %v724 = vpop.f32.mrf.mxu0
    %v725 = vpop.f32.mrf.mxu0
    %v726 = vadd.f32 %v581, %v725
    %v727 = vpop.f32.mrf.mxu0
    %728 = vmatprep.mubr.bf16.mxu0 0
    %729 = vmatmul.mubr.bf16.gmra.mxu0 %v414
    %v730 = vpop.f32.mrf.mxu0
    %v731 = vadd.f32 %v586, %v730
    %v732 = vpop.f32.mrf.mxu0
    %v733 = vpop.f32.mrf.mxu0
    %v734 = vadd.f32 %v589, %v733
    %v735 = vpop.f32.mrf.mxu0
    %736 = vdwg.mxu0
    %v737 = vld [vmem:[#allocation9] sm:$0x1]
    %v739 = vlaneseq
    %v740 = vshrl.u32 %v739, 7
    %v741 = vsub.s32 0, %v740
    %v742 = vrot.slane %v737, %v741
    %v744 = vadd.f32 %v675, %v742
    %v745 = vadd.f32 %v678, %v742
    %v746 = vadd.f32 %v683, %v742
    %v747 = vadd.f32 %v686, %v742
    %v748 = vadd.f32 %v691, %v742
    %v749 = vadd.f32 %v694, %v742
    %v750 = vadd.f32 %v699, %v742
    %v751 = vadd.f32 %v702, %v742
    %v752 = vadd.f32 %v707, %v742
    %v753 = vadd.f32 %v710, %v742
    %v754 = vadd.f32 %v715, %v742
    %v755 = vadd.f32 %v718, %v742
    %v756 = vadd.f32 %v723, %v742
    %v757 = vadd.f32 %v726, %v742
    %v758 = vadd.f32 %v731, %v742
    %v759 = vadd.f32 %v734, %v742
    %v760 = vmax.f32 %v744, 0.0
    %v761 = vmax.f32 %v745, 0.0
    %v762 = vmax.f32 %v746, 0.0
    %v763 = vmax.f32 %v747, 0.0
    %v764 = vmax.f32 %v748, 0.0
    %v765 = vmax.f32 %v749, 0.0
    %v766 = vmax.f32 %v750, 0.0
    %v767 = vmax.f32 %v751, 0.0
    %v768 = vmax.f32 %v752, 0.0
    %v769 = vmax.f32 %v753, 0.0
    %v770 = vmax.f32 %v754, 0.0
    %v771 = vmax.f32 %v755, 0.0
    %v772 = vmax.f32 %v756, 0.0
    %v773 = vmax.f32 %v757, 0.0
    %v774 = vmax.f32 %v758, 0.0
    %v775 = vmax.f32 %v759, 0.0
    %v776 = vpack.c.bf16 %v761, %v760
    %v777 = vpack.c.bf16 %v763, %v762
    %v778 = vpack.c.bf16 %v765, %v764
    %v779 = vpack.c.bf16 %v767, %v766
    %v780 = vpack.c.bf16 %v769, %v768
    %v781 = vpack.c.bf16 %v771, %v770
    %v782 = vpack.c.bf16 %v773, %v772
    %v783 = vpack.c.bf16 %v775, %v774
    %784 = vmatprep.subr.bf16.mxu0 0
    %785 = vmatpush1.bf16.msra.mxu0 %v783
    %786 = vmatprep.subr.bf16.mxu0 0
    %787 = vmatpush1.bf16.msra.mxu0 %v782
    %788 = vmatprep.subr.bf16.mxu0 0
    %789 = vmatpush1.bf16.msra.mxu0 %v781
    %790 = vmatprep.subr.bf16.mxu0 0
    %791 = vmatpush1.bf16.msra.mxu0 %v780
    %792 = vmatprep.subr.bf16.mxu0 0
    %793 = vmatpush1.bf16.msra.mxu0 %v779
    %794 = vmatprep.subr.bf16.mxu0 0
    %795 = vmatpush1.bf16.msra.mxu0 %v778
    %796 = vmatprep.subr.bf16.mxu0 0
    %797 = vmatpush1.bf16.msra.mxu0 %v777
    %798 = vmatprep.subr.bf16.mxu0 0
    %799 = vmatpush1.bf16.msra.mxu0 %v776
    %800 = vmatprep.subr.bf16.mxu0 0
    %801 = vmatpush2.bf16.msra.mxu0 0
    %802 = vmatprep.subr.bf16.mxu0 0
    %803 = vmatpush2.bf16.msra.mxu0 0
    %804 = vmatprep.subr.bf16.mxu0 0
    %805 = vmatpush2.bf16.msra.mxu0 0
    %806 = vmatprep.subr.bf16.mxu0 0
    %807 = vmatpush2.bf16.msra.mxu0 0
    %808 = vmatprep.subr.bf16.mxu0 0
    %809 = vmatpush2.bf16.msra.mxu0 0
    %810 = vmatprep.subr.bf16.mxu0 0
    %811 = vmatpush2.bf16.msra.mxu0 0
    %812 = vmatprep.subr.bf16.mxu0 0
    %813 = vmatpush2.bf16.msra.mxu0 0
    %814 = vmatprep.subr.bf16.mxu0 0
    %815 = vmatpush2.bf16.msra.mxu0 0
    %816 = vmatprep.mubr.bf16.mxu0 0
    %817 = vmatmul.mubr.bf16.gmra.mxu0 %v246
    %v818 = vpop.f32.mrf.mxu0
    %v819 = vadd.f32 0.0, %v818
    %v820 = vpop.f32.mrf.mxu0
    %v821 = vpop.f32.mrf.mxu0
    %v822 = vadd.f32 0.0, %v821
    %v823 = vpop.f32.mrf.mxu0
    %824 = vmatprep.mubr.bf16.mxu0 0
    %825 = vmatmul.mubr.bf16.gmra.mxu0 %v247
    %v826 = vpop.f32.mrf.mxu0
    %v827 = vadd.f32 0.0, %v826
    %v828 = vpop.f32.mrf.mxu0
    %v829 = vpop.f32.mrf.mxu0
    %v830 = vadd.f32 0.0, %v829
    %v831 = vpop.f32.mrf.mxu0
    %832 = vmatprep.mubr.bf16.mxu0 0
    %833 = vmatmul.mubr.bf16.gmra.mxu0 %v248
    %v834 = vpop.f32.mrf.mxu0
    %v835 = vadd.f32 0.0, %v834
    %v836 = vpop.f32.mrf.mxu0
    %v837 = vpop.f32.mrf.mxu0
    %v838 = vadd.f32 0.0, %v837
    %v839 = vpop.f32.mrf.mxu0
    %840 = vmatprep.mubr.bf16.mxu0 0
    %841 = vmatmul.mubr.bf16.gmra.mxu0 %v249
    %v842 = vpop.f32.mrf.mxu0
    %v843 = vadd.f32 0.0, %v842
    %v844 = vpop.f32.mrf.mxu0
    %v845 = vpop.f32.mrf.mxu0
    %v846 = vadd.f32 0.0, %v845
    %v847 = vpop.f32.mrf.mxu0
    %848 = vmatprep.mubr.bf16.mxu0 0
    %849 = vmatmul.mubr.bf16.gmra.mxu0 %v250
    %v850 = vpop.f32.mrf.mxu0
    %v851 = vadd.f32 0.0, %v850
    %v852 = vpop.f32.mrf.mxu0
    %v853 = vpop.f32.mrf.mxu0
    %v854 = vadd.f32 0.0, %v853
    %v855 = vpop.f32.mrf.mxu0
    %856 = vmatprep.mubr.bf16.mxu0 0
    %857 = vmatmul.mubr.bf16.gmra.mxu0 %v251
    %v858 = vpop.f32.mrf.mxu0
    %v859 = vadd.f32 0.0, %v858
    %v860 = vpop.f32.mrf.mxu0
    %v861 = vpop.f32.mrf.mxu0
    %v862 = vadd.f32 0.0, %v861
    %v863 = vpop.f32.mrf.mxu0
    %864 = vmatprep.mubr.bf16.mxu0 0
    %865 = vmatmul.mubr.bf16.gmra.mxu0 %v252
    %v866 = vpop.f32.mrf.mxu0
    %v867 = vadd.f32 0.0, %v866
    %v868 = vpop.f32.mrf.mxu0
    %v869 = vpop.f32.mrf.mxu0
    %v870 = vadd.f32 0.0, %v869
    %v871 = vpop.f32.mrf.mxu0
    %872 = vmatprep.mubr.bf16.mxu0 0
    %873 = vmatmul.mubr.bf16.gmra.mxu0 %v253
    %v874 = vpop.f32.mrf.mxu0
    %v875 = vadd.f32 0.0, %v874
    %v876 = vpop.f32.mrf.mxu0
    %v877 = vpop.f32.mrf.mxu0
    %v878 = vadd.f32 0.0, %v877
    %v879 = vpop.f32.mrf.mxu0
    %880 = vdwg.mxu0
    %v881 = vpack.c.bf16 %v822, %v819
    %v882 = vpack.c.bf16 %v830, %v827
    %v883 = vpack.c.bf16 %v838, %v835
    %v884 = vpack.c.bf16 %v846, %v843
    %v885 = vpack.c.bf16 %v854, %v851
    %v886 = vpack.c.bf16 %v862, %v859
    %v887 = vpack.c.bf16 %v870, %v867
    %v888 = vpack.c.bf16 %v878, %v875
    %v889 = vld [vmem:[#allocation10] sm:$0xf]
    %v890 = vld [vmem:[#allocation10 + $0x4] sm:$0xf]
    %v891 = vld [vmem:[#allocation10 + $0x8] sm:$0xf]
    %v892 = vld [vmem:[#allocation10 + $0xc] sm:$0xf]
    %v893 = vld [vmem:[#allocation10 + $0x10] sm:$0xf]
    %v894 = vld [vmem:[#allocation10 + $0x14] sm:$0xf]
    %v895 = vld [vmem:[#allocation10 + $0x18] sm:$0xf]
    %v896 = vld [vmem:[#allocation10 + $0x1c] sm:$0xf]
    %v897 = vld [vmem:[#allocation10 + $0x20] sm:$0xf]
    %v898 = vld [vmem:[#allocation10 + $0x24] sm:$0xf]
    %v899 = vld [vmem:[#allocation10 + $0x28] sm:$0xf]
    %v900 = vld [vmem:[#allocation10 + $0x2c] sm:$0xf]
    %v901 = vld [vmem:[#allocation10 + $0x30] sm:$0xf]
    %v902 = vld [vmem:[#allocation10 + $0x34] sm:$0xf]
    %v903 = vld [vmem:[#allocation10 + $0x38] sm:$0xf]
    %v904 = vld [vmem:[#allocation10 + $0x3c] sm:$0xf]
    %v905 = vld [vmem:[#allocation12] sm:$0xf]
    %v906 = vld [vmem:[#allocation12 + $0x4] sm:$0xf]
    %v907 = vld [vmem:[#allocation12 + $0x8] sm:$0xf]
    %v908 = vld [vmem:[#allocation12 + $0xc] sm:$0xf]
    %v909 = vld [vmem:[#allocation12 + $0x10] sm:$0xf]
    %v910 = vld [vmem:[#allocation12 + $0x14] sm:$0xf]
    %v911 = vld [vmem:[#allocation12 + $0x18] sm:$0xf]
    %v912 = vld [vmem:[#allocation12 + $0x1c] sm:$0xf]
    %v913 = vld [vmem:[#allocation12 + $0x20] sm:$0xf]
    %v914 = vld [vmem:[#allocation12 + $0x24] sm:$0xf]
    %v915 = vld [vmem:[#allocation12 + $0x28] sm:$0xf]
    %v916 = vld [vmem:[#allocation12 + $0x2c] sm:$0xf]
    %v917 = vld [vmem:[#allocation12 + $0x30] sm:$0xf]
    %v918 = vld [vmem:[#allocation12 + $0x34] sm:$0xf]
    %v919 = vld [vmem:[#allocation12 + $0x38] sm:$0xf]
    %v920 = vld [vmem:[#allocation12 + $0x3c] sm:$0xf]
    %v937 = vunpack.c.l.b16 %v905
    %v938 = vunpack.c.l.b16 %v906
    %v939 = vunpack.c.l.b16 %v907
    %v940 = vunpack.c.l.b16 %v908
    %v941 = vunpack.c.l.b16 %v909
    %v942 = vunpack.c.l.b16 %v910
    %v943 = vunpack.c.l.b16 %v911
    %v944 = vunpack.c.l.b16 %v912
    %v945 = vunpack.c.l.b16 %v913
    %v946 = vunpack.c.l.b16 %v914
    %v947 = vunpack.c.l.b16 %v915
    %v948 = vunpack.c.l.b16 %v916
    %v949 = vunpack.c.l.b16 %v917
    %v950 = vunpack.c.l.b16 %v918
    %v951 = vunpack.c.l.b16 %v919
    %v952 = vunpack.c.l.b16 %v920
    %v953 = vpack.c.b16 %v938, %v937
    %v954 = vpack.c.b16 %v940, %v939
    %v955 = vpack.c.b16 %v942, %v941
    %v956 = vpack.c.b16 %v944, %v943
    %v957 = vpack.c.b16 %v946, %v945
    %v958 = vpack.c.b16 %v948, %v947
    %v959 = vpack.c.b16 %v950, %v949
    %v960 = vpack.c.b16 %v952, %v951
    %969 = vmatprep.subr.bf16.mxu0 0
    %970 = vmatpush1.bf16.msra.mxu0 %v960
    %971 = vmatprep.subr.bf16.mxu0 0
    %972 = vmatpush1.bf16.msra.mxu0 %v959
    %973 = vmatprep.subr.bf16.mxu0 0
    %974 = vmatpush1.bf16.msra.mxu0 %v958
    %975 = vmatprep.subr.bf16.mxu0 0
    %976 = vmatpush1.bf16.msra.mxu0 %v957
    %977 = vmatprep.subr.bf16.mxu0 0
    %978 = vmatpush1.bf16.msra.mxu0 %v956
    %979 = vmatprep.subr.bf16.mxu0 0
    %980 = vmatpush1.bf16.msra.mxu0 %v955
    %981 = vmatprep.subr.bf16.mxu0 0
    %982 = vmatpush1.bf16.msra.mxu0 %v954
    %983 = vmatprep.subr.bf16.mxu0 0
    %984 = vmatpush1.bf16.msra.mxu0 %v953
    %985 = vmatprep.subr.bf16.mxu0 0
    %986 = vmatpush2.bf16.msra.mxu0 0
    %987 = vmatprep.subr.bf16.mxu0 0
    %988 = vmatpush2.bf16.msra.mxu0 0
    %989 = vmatprep.subr.bf16.mxu0 0
    %990 = vmatpush2.bf16.msra.mxu0 0
    %991 = vmatprep.subr.bf16.mxu0 0
    %992 = vmatpush2.bf16.msra.mxu0 0
    %993 = vmatprep.subr.bf16.mxu0 0
    %994 = vmatpush2.bf16.msra.mxu0 0
    %995 = vmatprep.subr.bf16.mxu0 0
    %996 = vmatpush2.bf16.msra.mxu0 0
    %997 = vmatprep.subr.bf16.mxu0 0
    %998 = vmatpush2.bf16.msra.mxu0 0
    %999 = vmatprep.subr.bf16.mxu0 0
    %1000 = vmatpush2.bf16.msra.mxu0 0
    %1001 = vmatprep.mubr.bf16.mxu0 0
    %1002 = vmatmul.mubr.bf16.gmra.mxu0 %v776
    %v1003 = vpop.f32.mrf.mxu0
    %v1004 = vadd.f32 0.0, %v1003
    %v1005 = vpop.f32.mrf.mxu0
    %v1006 = vpop.f32.mrf.mxu0
    %v1007 = vadd.f32 0.0, %v1006
    %v1008 = vpop.f32.mrf.mxu0
    %1009 = vmatprep.mubr.bf16.mxu0 0
    %1010 = vmatmul.mubr.bf16.gmra.mxu0 %v777
    %v1011 = vpop.f32.mrf.mxu0
    %v1012 = vadd.f32 0.0, %v1011
    %v1013 = vpop.f32.mrf.mxu0
    %v1014 = vpop.f32.mrf.mxu0
    %v1015 = vadd.f32 0.0, %v1014
    %v1016 = vpop.f32.mrf.mxu0
    %1017 = vmatprep.mubr.bf16.mxu0 0
    %1018 = vmatmul.mubr.bf16.gmra.mxu0 %v778
    %v1019 = vpop.f32.mrf.mxu0
    %v1020 = vadd.f32 0.0, %v1019
    %v1021 = vpop.f32.mrf.mxu0
    %v1022 = vpop.f32.mrf.mxu0
    %v1023 = vadd.f32 0.0, %v1022
    %v1024 = vpop.f32.mrf.mxu0
    %1025 = vmatprep.mubr.bf16.mxu0 0
    %1026 = vmatmul.mubr.bf16.gmra.mxu0 %v779
    %v1027 = vpop.f32.mrf.mxu0
    %v1028 = vadd.f32 0.0, %v1027
    %v1029 = vpop.f32.mrf.mxu0
    %v1030 = vpop.f32.mrf.mxu0
    %v1031 = vadd.f32 0.0, %v1030
    %v1032 = vpop.f32.mrf.mxu0
    %1033 = vmatprep.mubr.bf16.mxu0 0
    %1034 = vmatmul.mubr.bf16.gmra.mxu0 %v780
    %v1035 = vpop.f32.mrf.mxu0
    %v1036 = vadd.f32 0.0, %v1035
    %v1037 = vpop.f32.mrf.mxu0
    %v1038 = vpop.f32.mrf.mxu0
    %v1039 = vadd.f32 0.0, %v1038
    %v1040 = vpop.f32.mrf.mxu0
    %1041 = vmatprep.mubr.bf16.mxu0 0
    %1042 = vmatmul.mubr.bf16.gmra.mxu0 %v781
    %v1043 = vpop.f32.mrf.mxu0
    %v1044 = vadd.f32 0.0, %v1043
    %v1045 = vpop.f32.mrf.mxu0
    %v1046 = vpop.f32.mrf.mxu0
    %v1047 = vadd.f32 0.0, %v1046
    %v1048 = vpop.f32.mrf.mxu0
    %1049 = vmatprep.mubr.bf16.mxu0 0
    %1050 = vmatmul.mubr.bf16.gmra.mxu0 %v782
    %v1051 = vpop.f32.mrf.mxu0
    %v1052 = vadd.f32 0.0, %v1051
    %v1053 = vpop.f32.mrf.mxu0
    %v1054 = vpop.f32.mrf.mxu0
    %v1055 = vadd.f32 0.0, %v1054
    %v1056 = vpop.f32.mrf.mxu0
    %1057 = vmatprep.mubr.bf16.mxu0 0
    %1058 = vmatmul.mubr.bf16.gmra.mxu0 %v783
    %v1059 = vpop.f32.mrf.mxu0
    %v1060 = vadd.f32 0.0, %v1059
    %v1061 = vpop.f32.mrf.mxu0
    %v1062 = vpop.f32.mrf.mxu0
    %v1063 = vadd.f32 0.0, %v1062
    %v1064 = vpop.f32.mrf.mxu0
    %1065 = vdwg.mxu0
    %v1082 = vunpack.c.l.b16 %v889
    %v1083 = vunpack.c.l.b16 %v890
    %v1084 = vunpack.c.l.b16 %v891
    %v1085 = vunpack.c.l.b16 %v892
    %v1086 = vunpack.c.l.b16 %v893
    %v1087 = vunpack.c.l.b16 %v894
    %v1088 = vunpack.c.l.b16 %v895
    %v1089 = vunpack.c.l.b16 %v896
    %v1090 = vunpack.c.l.b16 %v897
    %v1091 = vunpack.c.l.b16 %v898
    %v1092 = vunpack.c.l.b16 %v899
    %v1093 = vunpack.c.l.b16 %v900
    %v1094 = vunpack.c.l.b16 %v901
    %v1095 = vunpack.c.l.b16 %v902
    %v1096 = vunpack.c.l.b16 %v903
    %v1097 = vunpack.c.l.b16 %v904
    %v1098 = vpack.c.b16 %v1083, %v1082
    %v1099 = vpack.c.b16 %v1085, %v1084
    %v1100 = vpack.c.b16 %v1087, %v1086
    %v1101 = vpack.c.b16 %v1089, %v1088
    %v1102 = vpack.c.b16 %v1091, %v1090
    %v1103 = vpack.c.b16 %v1093, %v1092
    %v1104 = vpack.c.b16 %v1095, %v1094
    %v1105 = vpack.c.b16 %v1097, %v1096
    %1114 = vmatprep.subr.bf16.mxu0 0
    %1115 = vmatpush1.bf16.msra.mxu0 %v1105
    %1116 = vmatprep.subr.bf16.mxu0 0
    %1117 = vmatpush1.bf16.msra.mxu0 %v1104
    %1118 = vmatprep.subr.bf16.mxu0 0
    %1119 = vmatpush1.bf16.msra.mxu0 %v1103
    %1120 = vmatprep.subr.bf16.mxu0 0
    %1121 = vmatpush1.bf16.msra.mxu0 %v1102
    %1122 = vmatprep.subr.bf16.mxu0 0
    %1123 = vmatpush1.bf16.msra.mxu0 %v1101
    %1124 = vmatprep.subr.bf16.mxu0 0
    %1125 = vmatpush1.bf16.msra.mxu0 %v1100
    %1126 = vmatprep.subr.bf16.mxu0 0
    %1127 = vmatpush1.bf16.msra.mxu0 %v1099
    %1128 = vmatprep.subr.bf16.mxu0 0
    %1129 = vmatpush1.bf16.msra.mxu0 %v1098
    %1130 = vmatprep.subr.bf16.mxu0 0
    %1131 = vmatpush2.bf16.msra.mxu0 0
    %1132 = vmatprep.subr.bf16.mxu0 0
    %1133 = vmatpush2.bf16.msra.mxu0 0
    %1134 = vmatprep.subr.bf16.mxu0 0
    %1135 = vmatpush2.bf16.msra.mxu0 0
    %1136 = vmatprep.subr.bf16.mxu0 0
    %1137 = vmatpush2.bf16.msra.mxu0 0
    %1138 = vmatprep.subr.bf16.mxu0 0
    %1139 = vmatpush2.bf16.msra.mxu0 0
    %1140 = vmatprep.subr.bf16.mxu0 0
    %1141 = vmatpush2.bf16.msra.mxu0 0
    %1142 = vmatprep.subr.bf16.mxu0 0
    %1143 = vmatpush2.bf16.msra.mxu0 0
    %1144 = vmatprep.subr.bf16.mxu0 0
    %1145 = vmatpush2.bf16.msra.mxu0 0
    %1146 = vmatprep.mubr.bf16.mxu0 0
    %1147 = vmatmul.mubr.bf16.gmra.mxu0 %v881
    %v1148 = vpop.f32.mrf.mxu0
    %v1149 = vadd.f32 %v1004, %v1148
    %v1150 = vpop.f32.mrf.mxu0
    %v1151 = vpop.f32.mrf.mxu0
    %v1152 = vadd.f32 %v1007, %v1151
    %v1153 = vpop.f32.mrf.mxu0
    %1154 = vmatprep.mubr.bf16.mxu0 0
    %1155 = vmatmul.mubr.bf16.gmra.mxu0 %v882
    %v1156 = vpop.f32.mrf.mxu0
    %v1157 = vadd.f32 %v1012, %v1156
    %v1158 = vpop.f32.mrf.mxu0
    %v1159 = vpop.f32.mrf.mxu0
    %v1160 = vadd.f32 %v1015, %v1159
    %v1161 = vpop.f32.mrf.mxu0
    %1162 = vmatprep.mubr.bf16.mxu0 0
    %1163 = vmatmul.mubr.bf16.gmra.mxu0 %v883
    %v1164 = vpop.f32.mrf.mxu0
    %v1165 = vadd.f32 %v1020, %v1164
    %v1166 = vpop.f32.mrf.mxu0
    %v1167 = vpop.f32.mrf.mxu0
    %v1168 = vadd.f32 %v1023, %v1167
    %v1169 = vpop.f32.mrf.mxu0
    %1170 = vmatprep.mubr.bf16.mxu0 0
    %1171 = vmatmul.mubr.bf16.gmra.mxu0 %v884
    %v1172 = vpop.f32.mrf.mxu0
    %v1173 = vadd.f32 %v1028, %v1172
    %v1174 = vpop.f32.mrf.mxu0
    %v1175 = vpop.f32.mrf.mxu0
    %v1176 = vadd.f32 %v1031, %v1175
    %v1177 = vpop.f32.mrf.mxu0
    %1178 = vmatprep.mubr.bf16.mxu0 0
    %1179 = vmatmul.mubr.bf16.gmra.mxu0 %v885
    %v1180 = vpop.f32.mrf.mxu0
    %v1181 = vadd.f32 %v1036, %v1180
    %v1182 = vpop.f32.mrf.mxu0
    %v1183 = vpop.f32.mrf.mxu0
    %v1184 = vadd.f32 %v1039, %v1183
    %v1185 = vpop.f32.mrf.mxu0
    %1186 = vmatprep.mubr.bf16.mxu0 0
    %1187 = vmatmul.mubr.bf16.gmra.mxu0 %v886
    %v1188 = vpop.f32.mrf.mxu0
    %v1189 = vadd.f32 %v1044, %v1188
    %v1190 = vpop.f32.mrf.mxu0
    %v1191 = vpop.f32.mrf.mxu0
    %v1192 = vadd.f32 %v1047, %v1191
    %v1193 = vpop.f32.mrf.mxu0
    %1194 = vmatprep.mubr.bf16.mxu0 0
    %1195 = vmatmul.mubr.bf16.gmra.mxu0 %v887
    %v1196 = vpop.f32.mrf.mxu0
    %v1197 = vadd.f32 %v1052, %v1196
    %v1198 = vpop.f32.mrf.mxu0
    %v1199 = vpop.f32.mrf.mxu0
    %v1200 = vadd.f32 %v1055, %v1199
    %v1201 = vpop.f32.mrf.mxu0
    %1202 = vmatprep.mubr.bf16.mxu0 0
    %1203 = vmatmul.mubr.bf16.gmra.mxu0 %v888
    %v1204 = vpop.f32.mrf.mxu0
    %v1205 = vadd.f32 %v1060, %v1204
    %v1206 = vpop.f32.mrf.mxu0
    %v1207 = vpop.f32.mrf.mxu0
    %v1208 = vadd.f32 %v1063, %v1207
    %v1209 = vpop.f32.mrf.mxu0
    %1210 = vdwg.mxu0
    %v1211 = vld [vmem:[%s8] sm:$0x1]
    %v1213 = vlaneseq
    %v1214 = vshrl.u32 %v1213, 7
    %v1215 = vsub.s32 0, %v1214
    %v1216 = vrot.slane %v1211, %v1215
    %v1218 = vadd.f32 %v1149, %v1216
    %v1219 = vadd.f32 %v1152, %v1216
    %v1220 = vadd.f32 %v1157, %v1216
    %v1221 = vadd.f32 %v1160, %v1216
    %v1222 = vadd.f32 %v1165, %v1216
    %v1223 = vadd.f32 %v1168, %v1216
    %v1224 = vadd.f32 %v1173, %v1216
    %v1225 = vadd.f32 %v1176, %v1216
    %v1226 = vadd.f32 %v1181, %v1216
    %v1227 = vadd.f32 %v1184, %v1216
    %v1228 = vadd.f32 %v1189, %v1216
    %v1229 = vadd.f32 %v1192, %v1216
    %v1230 = vadd.f32 %v1197, %v1216
    %v1231 = vadd.f32 %v1200, %v1216
    %v1232 = vadd.f32 %v1205, %v1216
    %v1233 = vadd.f32 %v1208, %v1216
    %v1234 = vmax.f32 %v1218, 0.0
    %v1235 = vmax.f32 %v1219, 0.0
    %v1236 = vmax.f32 %v1220, 0.0
    %v1237 = vmax.f32 %v1221, 0.0
    %v1238 = vmax.f32 %v1222, 0.0
    %v1239 = vmax.f32 %v1223, 0.0
    %v1240 = vmax.f32 %v1224, 0.0
    %v1241 = vmax.f32 %v1225, 0.0
    %v1242 = vmax.f32 %v1226, 0.0
    %v1243 = vmax.f32 %v1227, 0.0
    %v1244 = vmax.f32 %v1228, 0.0
    %v1245 = vmax.f32 %v1229, 0.0
    %v1246 = vmax.f32 %v1230, 0.0
    %v1247 = vmax.f32 %v1231, 0.0
    %v1248 = vmax.f32 %v1232, 0.0
    %v1249 = vmax.f32 %v1233, 0.0
    %v1250 = vpack.c.bf16 %v1235, %v1234
    %v1251 = vpack.c.bf16 %v1237, %v1236
    %v1252 = vpack.c.bf16 %v1239, %v1238
    %v1253 = vpack.c.bf16 %v1241, %v1240
    %v1254 = vpack.c.bf16 %v1243, %v1242
    %v1255 = vpack.c.bf16 %v1245, %v1244
    %v1256 = vpack.c.bf16 %v1247, %v1246
    %v1257 = vpack.c.bf16 %v1249, %v1248
    %1258 = vmatprep.subr.bf16.mxu0 0
    %1259 = vmatpush1.bf16.msra.mxu0 %v1257
    %1260 = vmatprep.subr.bf16.mxu0 0
    %1261 = vmatpush1.bf16.msra.mxu0 %v1256
    %1262 = vmatprep.subr.bf16.mxu0 0
    %1263 = vmatpush1.bf16.msra.mxu0 %v1255
    %1264 = vmatprep.subr.bf16.mxu0 0
    %1265 = vmatpush1.bf16.msra.mxu0 %v1254
    %1266 = vmatprep.subr.bf16.mxu0 0
    %1267 = vmatpush1.bf16.msra.mxu0 %v1253
    %1268 = vmatprep.subr.bf16.mxu0 0
    %1269 = vmatpush1.bf16.msra.mxu0 %v1252
    %1270 = vmatprep.subr.bf16.mxu0 0
    %1271 = vmatpush1.bf16.msra.mxu0 %v1251
    %1272 = vmatprep.subr.bf16.mxu0 0
    %1273 = vmatpush1.bf16.msra.mxu0 %v1250
    %1274 = vmatprep.subr.bf16.mxu0 0
    %1275 = vmatpush2.bf16.msra.mxu0 0
    %1276 = vmatprep.subr.bf16.mxu0 0
    %1277 = vmatpush2.bf16.msra.mxu0 0
    %1278 = vmatprep.subr.bf16.mxu0 0
    %1279 = vmatpush2.bf16.msra.mxu0 0
    %1280 = vmatprep.subr.bf16.mxu0 0
    %1281 = vmatpush2.bf16.msra.mxu0 0
    %1282 = vmatprep.subr.bf16.mxu0 0
    %1283 = vmatpush2.bf16.msra.mxu0 0
    %1284 = vmatprep.subr.bf16.mxu0 0
    %1285 = vmatpush2.bf16.msra.mxu0 0
    %1286 = vmatprep.subr.bf16.mxu0 0
    %1287 = vmatpush2.bf16.msra.mxu0 0
    %1288 = vmatprep.subr.bf16.mxu0 0
    %1289 = vmatpush2.bf16.msra.mxu0 0
    %1290 = vmatprep.mubr.bf16.mxu0 0
    %1291 = vmatmul.mubr.bf16.gmra.mxu0 %v246
    %v1292 = vpop.f32.mrf.mxu0
    %v1293 = vadd.f32 0.0, %v1292
    %v1294 = vpop.f32.mrf.mxu0
    %v1295 = vpop.f32.mrf.mxu0
    %v1296 = vadd.f32 0.0, %v1295
    %v1297 = vpop.f32.mrf.mxu0
    %1298 = vmatprep.mubr.bf16.mxu0 0
    %1299 = vmatmul.mubr.bf16.gmra.mxu0 %v247
    %v1300 = vpop.f32.mrf.mxu0
    %v1301 = vadd.f32 0.0, %v1300
    %v1302 = vpop.f32.mrf.mxu0
    %v1303 = vpop.f32.mrf.mxu0
    %v1304 = vadd.f32 0.0, %v1303
    %v1305 = vpop.f32.mrf.mxu0
    %1306 = vmatprep.mubr.bf16.mxu0 0
    %1307 = vmatmul.mubr.bf16.gmra.mxu0 %v248
    %v1308 = vpop.f32.mrf.mxu0
    %v1309 = vadd.f32 0.0, %v1308
    %v1310 = vpop.f32.mrf.mxu0
    %v1311 = vpop.f32.mrf.mxu0
    %v1312 = vadd.f32 0.0, %v1311
    %v1313 = vpop.f32.mrf.mxu0
    %1314 = vmatprep.mubr.bf16.mxu0 0
    %1315 = vmatmul.mubr.bf16.gmra.mxu0 %v249
    %v1316 = vpop.f32.mrf.mxu0
    %v1317 = vadd.f32 0.0, %v1316
    %v1318 = vpop.f32.mrf.mxu0
    %v1319 = vpop.f32.mrf.mxu0
    %v1320 = vadd.f32 0.0, %v1319
    %v1321 = vpop.f32.mrf.mxu0
    %1322 = vmatprep.mubr.bf16.mxu0 0
    %1323 = vmatmul.mubr.bf16.gmra.mxu0 %v250
    %v1324 = vpop.f32.mrf.mxu0
    %v1325 = vadd.f32 0.0, %v1324
    %v1326 = vpop.f32.mrf.mxu0
    %v1327 = vpop.f32.mrf.mxu0
    %v1328 = vadd.f32 0.0, %v1327
    %v1329 = vpop.f32.mrf.mxu0
    %1330 = vmatprep.mubr.bf16.mxu0 0
    %1331 = vmatmul.mubr.bf16.gmra.mxu0 %v251
    %v1332 = vpop.f32.mrf.mxu0
    %v1333 = vadd.f32 0.0, %v1332
    %v1334 = vpop.f32.mrf.mxu0
    %v1335 = vpop.f32.mrf.mxu0
    %v1336 = vadd.f32 0.0, %v1335
    %v1337 = vpop.f32.mrf.mxu0
    %1338 = vmatprep.mubr.bf16.mxu0 0
    %1339 = vmatmul.mubr.bf16.gmra.mxu0 %v252
    %v1340 = vpop.f32.mrf.mxu0
    %v1341 = vadd.f32 0.0, %v1340
    %v1342 = vpop.f32.mrf.mxu0
    %v1343 = vpop.f32.mrf.mxu0
    %v1344 = vadd.f32 0.0, %v1343
    %v1345 = vpop.f32.mrf.mxu0
    %1346 = vmatprep.mubr.bf16.mxu0 0
    %1347 = vmatmul.mubr.bf16.gmra.mxu0 %v253
    %v1348 = vpop.f32.mrf.mxu0
    %v1349 = vadd.f32 0.0, %v1348
    %v1350 = vpop.f32.mrf.mxu0
    %v1351 = vpop.f32.mrf.mxu0
    %v1352 = vadd.f32 0.0, %v1351
    %v1353 = vpop.f32.mrf.mxu0
    %1354 = vdwg.mxu0
    %v1355 = vpack.c.bf16 %v1296, %v1293
    %v1356 = vpack.c.bf16 %v1304, %v1301
    %v1357 = vpack.c.bf16 %v1312, %v1309
    %v1358 = vpack.c.bf16 %v1320, %v1317
    %v1359 = vpack.c.bf16 %v1328, %v1325
    %v1360 = vpack.c.bf16 %v1336, %v1333
    %v1361 = vpack.c.bf16 %v1344, %v1341
    %v1362 = vpack.c.bf16 %v1352, %v1349
    %v1363 = vld [vmem:[#allocation13] sm:$0xf]
    %v1364 = vld [vmem:[#allocation13 + $0x4] sm:$0xf]
    %v1365 = vld [vmem:[#allocation13 + $0x8] sm:$0xf]
    %v1366 = vld [vmem:[#allocation13 + $0xc] sm:$0xf]
    %v1367 = vld [vmem:[#allocation13 + $0x10] sm:$0xf]
    %v1368 = vld [vmem:[#allocation13 + $0x14] sm:$0xf]
    %v1369 = vld [vmem:[#allocation13 + $0x18] sm:$0xf]
    %v1370 = vld [vmem:[#allocation13 + $0x1c] sm:$0xf]
    %v1371 = vld [vmem:[#allocation13 + $0x20] sm:$0xf]
    %v1372 = vld [vmem:[#allocation13 + $0x24] sm:$0xf]
    %v1373 = vld [vmem:[#allocation13 + $0x28] sm:$0xf]
    %v1374 = vld [vmem:[#allocation13 + $0x2c] sm:$0xf]
    %v1375 = vld [vmem:[#allocation13 + $0x30] sm:$0xf]
    %v1376 = vld [vmem:[#allocation13 + $0x34] sm:$0xf]
    %v1377 = vld [vmem:[#allocation13 + $0x38] sm:$0xf]
    %v1378 = vld [vmem:[#allocation13 + $0x3c] sm:$0xf]
    %v1379 = vld [vmem:[#allocation15] sm:$0xf]
    %v1380 = vld [vmem:[#allocation15 + $0x4] sm:$0xf]
    %v1381 = vld [vmem:[#allocation15 + $0x8] sm:$0xf]
    %v1382 = vld [vmem:[#allocation15 + $0xc] sm:$0xf]
    %v1383 = vld [vmem:[#allocation15 + $0x10] sm:$0xf]
    %v1384 = vld [vmem:[#allocation15 + $0x14] sm:$0xf]
    %v1385 = vld [vmem:[#allocation15 + $0x18] sm:$0xf]
    %v1386 = vld [vmem:[#allocation15 + $0x1c] sm:$0xf]
    %v1387 = vld [vmem:[#allocation15 + $0x20] sm:$0xf]
    %v1388 = vld [vmem:[#allocation15 + $0x24] sm:$0xf]
    %v1389 = vld [vmem:[#allocation15 + $0x28] sm:$0xf]
    %v1390 = vld [vmem:[#allocation15 + $0x2c] sm:$0xf]
    %v1391 = vld [vmem:[#allocation15 + $0x30] sm:$0xf]
    %v1392 = vld [vmem:[#allocation15 + $0x34] sm:$0xf]
    %v1393 = vld [vmem:[#allocation15 + $0x38] sm:$0xf]
    %v1394 = vld [vmem:[#allocation15 + $0x3c] sm:$0xf]
    %v1411 = vunpack.c.l.b16 %v1379
    %v1412 = vunpack.c.l.b16 %v1380
    %v1413 = vunpack.c.l.b16 %v1381
    %v1414 = vunpack.c.l.b16 %v1382
    %v1415 = vunpack.c.l.b16 %v1383
    %v1416 = vunpack.c.l.b16 %v1384
    %v1417 = vunpack.c.l.b16 %v1385
    %v1418 = vunpack.c.l.b16 %v1386
    %v1419 = vunpack.c.l.b16 %v1387
    %v1420 = vunpack.c.l.b16 %v1388
    %v1421 = vunpack.c.l.b16 %v1389
    %v1422 = vunpack.c.l.b16 %v1390
    %v1423 = vunpack.c.l.b16 %v1391
    %v1424 = vunpack.c.l.b16 %v1392
    %v1425 = vunpack.c.l.b16 %v1393
    %v1426 = vunpack.c.l.b16 %v1394
    %v1427 = vpack.c.b16 %v1412, %v1411
    %v1428 = vpack.c.b16 %v1414, %v1413
    %v1429 = vpack.c.b16 %v1416, %v1415
    %v1430 = vpack.c.b16 %v1418, %v1417
    %v1431 = vpack.c.b16 %v1420, %v1419
    %v1432 = vpack.c.b16 %v1422, %v1421
    %v1433 = vpack.c.b16 %v1424, %v1423
    %v1434 = vpack.c.b16 %v1426, %v1425
    %1443 = vmatprep.subr.bf16.mxu0 0
    %1444 = vmatpush1.bf16.msra.mxu0 %v1434
    %1445 = vmatprep.subr.bf16.mxu0 0
    %1446 = vmatpush1.bf16.msra.mxu0 %v1433
    %1447 = vmatprep.subr.bf16.mxu0 0
    %1448 = vmatpush1.bf16.msra.mxu0 %v1432
    %1449 = vmatprep.subr.bf16.mxu0 0
    %1450 = vmatpush1.bf16.msra.mxu0 %v1431
    %1451 = vmatprep.subr.bf16.mxu0 0
    %1452 = vmatpush1.bf16.msra.mxu0 %v1430
    %1453 = vmatprep.subr.bf16.mxu0 0
    %1454 = vmatpush1.bf16.msra.mxu0 %v1429
    %1455 = vmatprep.subr.bf16.mxu0 0
    %1456 = vmatpush1.bf16.msra.mxu0 %v1428
    %1457 = vmatprep.subr.bf16.mxu0 0
    %1458 = vmatpush1.bf16.msra.mxu0 %v1427
    %1459 = vmatprep.subr.bf16.mxu0 0
    %1460 = vmatpush2.bf16.msra.mxu0 0
    %1461 = vmatprep.subr.bf16.mxu0 0
    %1462 = vmatpush2.bf16.msra.mxu0 0
    %1463 = vmatprep.subr.bf16.mxu0 0
    %1464 = vmatpush2.bf16.msra.mxu0 0
    %1465 = vmatprep.subr.bf16.mxu0 0
    %1466 = vmatpush2.bf16.msra.mxu0 0
    %1467 = vmatprep.subr.bf16.mxu0 0
    %1468 = vmatpush2.bf16.msra.mxu0 0
    %1469 = vmatprep.subr.bf16.mxu0 0
    %1470 = vmatpush2.bf16.msra.mxu0 0
    %1471 = vmatprep.subr.bf16.mxu0 0
    %1472 = vmatpush2.bf16.msra.mxu0 0
    %1473 = vmatprep.subr.bf16.mxu0 0
    %1474 = vmatpush2.bf16.msra.mxu0 0
    %1475 = vmatprep.mubr.bf16.mxu0 0
    %1476 = vmatmul.mubr.bf16.gmra.mxu0 %v1250
    %v1477 = vpop.f32.mrf.mxu0
    %v1478 = vadd.f32 0.0, %v1477
    %v1479 = vpop.f32.mrf.mxu0
    %v1480 = vpop.f32.mrf.mxu0
    %v1481 = vadd.f32 0.0, %v1480
    %v1482 = vpop.f32.mrf.mxu0
    %1483 = vmatprep.mubr.bf16.mxu0 0
    %1484 = vmatmul.mubr.bf16.gmra.mxu0 %v1251
    %v1485 = vpop.f32.mrf.mxu0
    %v1486 = vadd.f32 0.0, %v1485
    %v1487 = vpop.f32.mrf.mxu0
    %v1488 = vpop.f32.mrf.mxu0
    %v1489 = vadd.f32 0.0, %v1488
    %v1490 = vpop.f32.mrf.mxu0
    %1491 = vmatprep.mubr.bf16.mxu0 0
    %1492 = vmatmul.mubr.bf16.gmra.mxu0 %v1252
    %v1493 = vpop.f32.mrf.mxu0
    %v1494 = vadd.f32 0.0, %v1493
    %v1495 = vpop.f32.mrf.mxu0
    %v1496 = vpop.f32.mrf.mxu0
    %v1497 = vadd.f32 0.0, %v1496
    %v1498 = vpop.f32.mrf.mxu0
    %1499 = vmatprep.mubr.bf16.mxu0 0
    %1500 = vmatmul.mubr.bf16.gmra.mxu0 %v1253
    %v1501 = vpop.f32.mrf.mxu0
    %v1502 = vadd.f32 0.0, %v1501
    %v1503 = vpop.f32.mrf.mxu0
    %v1504 = vpop.f32.mrf.mxu0
    %v1505 = vadd.f32 0.0, %v1504
    %v1506 = vpop.f32.mrf.mxu0
    %1507 = vmatprep.mubr.bf16.mxu0 0
    %1508 = vmatmul.mubr.bf16.gmra.mxu0 %v1254
    %v1509 = vpop.f32.mrf.mxu0
    %v1510 = vadd.f32 0.0, %v1509
    %v1511 = vpop.f32.mrf.mxu0
    %v1512 = vpop.f32.mrf.mxu0
    %v1513 = vadd.f32 0.0, %v1512
    %v1514 = vpop.f32.mrf.mxu0
    %1515 = vmatprep.mubr.bf16.mxu0 0
    %1516 = vmatmul.mubr.bf16.gmra.mxu0 %v1255
    %v1517 = vpop.f32.mrf.mxu0
    %v1518 = vadd.f32 0.0, %v1517
    %v1519 = vpop.f32.mrf.mxu0
    %v1520 = vpop.f32.mrf.mxu0
    %v1521 = vadd.f32 0.0, %v1520
    %v1522 = vpop.f32.mrf.mxu0
    %1523 = vmatprep.mubr.bf16.mxu0 0
    %1524 = vmatmul.mubr.bf16.gmra.mxu0 %v1256
    %v1525 = vpop.f32.mrf.mxu0
    %v1526 = vadd.f32 0.0, %v1525
    %v1527 = vpop.f32.mrf.mxu0
    %v1528 = vpop.f32.mrf.mxu0
    %v1529 = vadd.f32 0.0, %v1528
    %v1530 = vpop.f32.mrf.mxu0
    %1531 = vmatprep.mubr.bf16.mxu0 0
    %1532 = vmatmul.mubr.bf16.gmra.mxu0 %v1257
    %v1533 = vpop.f32.mrf.mxu0
    %v1534 = vadd.f32 0.0, %v1533
    %v1535 = vpop.f32.mrf.mxu0
    %v1536 = vpop.f32.mrf.mxu0
    %v1537 = vadd.f32 0.0, %v1536
    %v1538 = vpop.f32.mrf.mxu0
    %1539 = vdwg.mxu0
    %v1556 = vunpack.c.l.b16 %v1363
    %v1557 = vunpack.c.l.b16 %v1364
    %v1558 = vunpack.c.l.b16 %v1365
    %v1559 = vunpack.c.l.b16 %v1366
    %v1560 = vunpack.c.l.b16 %v1367
    %v1561 = vunpack.c.l.b16 %v1368
    %v1562 = vunpack.c.l.b16 %v1369
    %v1563 = vunpack.c.l.b16 %v1370
    %v1564 = vunpack.c.l.b16 %v1371
    %v1565 = vunpack.c.l.b16 %v1372
    %v1566 = vunpack.c.l.b16 %v1373
    %v1567 = vunpack.c.l.b16 %v1374
    %v1568 = vunpack.c.l.b16 %v1375
    %v1569 = vunpack.c.l.b16 %v1376
    %v1570 = vunpack.c.l.b16 %v1377
    %v1571 = vunpack.c.l.b16 %v1378
    %v1572 = vpack.c.b16 %v1557, %v1556
    %v1573 = vpack.c.b16 %v1559, %v1558
    %v1574 = vpack.c.b16 %v1561, %v1560
    %v1575 = vpack.c.b16 %v1563, %v1562
    %v1576 = vpack.c.b16 %v1565, %v1564
    %v1577 = vpack.c.b16 %v1567, %v1566
    %v1578 = vpack.c.b16 %v1569, %v1568
    %v1579 = vpack.c.b16 %v1571, %v1570
    %1588 = vmatprep.subr.bf16.mxu0 0
    %1589 = vmatpush1.bf16.msra.mxu0 %v1579
    %1590 = vmatprep.subr.bf16.mxu0 0
    %1591 = vmatpush1.bf16.msra.mxu0 %v1578
    %1592 = vmatprep.subr.bf16.mxu0 0
    %1593 = vmatpush1.bf16.msra.mxu0 %v1577
    %1594 = vmatprep.subr.bf16.mxu0 0
    %1595 = vmatpush1.bf16.msra.mxu0 %v1576
    %1596 = vmatprep.subr.bf16.mxu0 0
    %1597 = vmatpush1.bf16.msra.mxu0 %v1575
    %1598 = vmatprep.subr.bf16.mxu0 0
    %1599 = vmatpush1.bf16.msra.mxu0 %v1574
    %1600 = vmatprep.subr.bf16.mxu0 0
    %1601 = vmatpush1.bf16.msra.mxu0 %v1573
    %1602 = vmatprep.subr.bf16.mxu0 0
    %1603 = vmatpush1.bf16.msra.mxu0 %v1572
    %1604 = vmatprep.subr.bf16.mxu0 0
    %1605 = vmatpush2.bf16.msra.mxu0 0
    %1606 = vmatprep.subr.bf16.mxu0 0
    %1607 = vmatpush2.bf16.msra.mxu0 0
    %1608 = vmatprep.subr.bf16.mxu0 0
    %1609 = vmatpush2.bf16.msra.mxu0 0
    %1610 = vmatprep.subr.bf16.mxu0 0
    %1611 = vmatpush2.bf16.msra.mxu0 0
    %1612 = vmatprep.subr.bf16.mxu0 0
    %1613 = vmatpush2.bf16.msra.mxu0 0
    %1614 = vmatprep.subr.bf16.mxu0 0
    %1615 = vmatpush2.bf16.msra.mxu0 0
    %1616 = vmatprep.subr.bf16.mxu0 0
    %1617 = vmatpush2.bf16.msra.mxu0 0
    %1618 = vmatprep.subr.bf16.mxu0 0
    %1619 = vmatpush2.bf16.msra.mxu0 0
    %1620 = vmatprep.mubr.bf16.mxu0 0
    %1621 = vmatmul.mubr.bf16.gmra.mxu0 %v1355
    %v1622 = vpop.f32.mrf.mxu0
    %v1623 = vadd.f32 %v1478, %v1622
    %v1624 = vpop.f32.mrf.mxu0
    %v1625 = vpop.f32.mrf.mxu0
    %v1626 = vadd.f32 %v1481, %v1625
    %v1627 = vpop.f32.mrf.mxu0
    %1628 = vmatprep.mubr.bf16.mxu0 0
    %1629 = vmatmul.mubr.bf16.gmra.mxu0 %v1356
    %v1630 = vpop.f32.mrf.mxu0
    %v1631 = vadd.f32 %v1486, %v1630
    %v1632 = vpop.f32.mrf.mxu0
    %v1633 = vpop.f32.mrf.mxu0
    %v1634 = vadd.f32 %v1489, %v1633
    %v1635 = vpop.f32.mrf.mxu0
    %1636 = vmatprep.mubr.bf16.mxu0 0
    %1637 = vmatmul.mubr.bf16.gmra.mxu0 %v1357
    %v1638 = vpop.f32.mrf.mxu0
    %v1639 = vadd.f32 %v1494, %v1638
    %v1640 = vpop.f32.mrf.mxu0
    %v1641 = vpop.f32.mrf.mxu0
    %v1642 = vadd.f32 %v1497, %v1641
    %v1643 = vpop.f32.mrf.mxu0
    %1644 = vmatprep.mubr.bf16.mxu0 0
    %1645 = vmatmul.mubr.bf16.gmra.mxu0 %v1358
    %v1646 = vpop.f32.mrf.mxu0
    %v1647 = vadd.f32 %v1502, %v1646
    %v1648 = vpop.f32.mrf.mxu0
    %v1649 = vpop.f32.mrf.mxu0
    %v1650 = vadd.f32 %v1505, %v1649
    %v1651 = vpop.f32.mrf.mxu0
    %1652 = vmatprep.mubr.bf16.mxu0 0
    %1653 = vmatmul.mubr.bf16.gmra.mxu0 %v1359
    %v1654 = vpop.f32.mrf.mxu0
    %v1655 = vadd.f32 %v1510, %v1654
    %v1656 = vpop.f32.mrf.mxu0
    %v1657 = vpop.f32.mrf.mxu0
    %v1658 = vadd.f32 %v1513, %v1657
    %v1659 = vpop.f32.mrf.mxu0
    %1660 = vmatprep.mubr.bf16.mxu0 0
    %1661 = vmatmul.mubr.bf16.gmra.mxu0 %v1360
    %v1662 = vpop.f32.mrf.mxu0
    %v1663 = vadd.f32 %v1518, %v1662
    %v1664 = vpop.f32.mrf.mxu0
    %v1665 = vpop.f32.mrf.mxu0
    %v1666 = vadd.f32 %v1521, %v1665
    %v1667 = vpop.f32.mrf.mxu0
    %1668 = vmatprep.mubr.bf16.mxu0 0
    %1669 = vmatmul.mubr.bf16.gmra.mxu0 %v1361
    %v1670 = vpop.f32.mrf.mxu0
    %v1671 = vadd.f32 %v1526, %v1670
    %v1672 = vpop.f32.mrf.mxu0
    %v1673 = vpop.f32.mrf.mxu0
    %v1674 = vadd.f32 %v1529, %v1673
    %v1675 = vpop.f32.mrf.mxu0
    %1676 = vmatprep.mubr.bf16.mxu0 0
    %1677 = vmatmul.mubr.bf16.gmra.mxu0 %v1362
    %v1678 = vpop.f32.mrf.mxu0
    %v1679 = vadd.f32 %v1534, %v1678
    %v1680 = vpop.f32.mrf.mxu0
    %v1681 = vpop.f32.mrf.mxu0
    %v1682 = vadd.f32 %v1537, %v1681
    %v1683 = vpop.f32.mrf.mxu0
    %1684 = vdwg.mxu0
    %v1685 = vld [vmem:[%s11] sm:$0x1]
    %v1687 = vlaneseq
    %v1688 = vshrl.u32 %v1687, 7
    %v1689 = vsub.s32 0, %v1688
    %v1690 = vrot.slane %v1685, %v1689
    %v1692 = vadd.f32 %v1623, %v1690
    %v1693 = vadd.f32 %v1626, %v1690
    %v1694 = vadd.f32 %v1631, %v1690
    %v1695 = vadd.f32 %v1634, %v1690
    %v1696 = vadd.f32 %v1639, %v1690
    %v1697 = vadd.f32 %v1642, %v1690
    %v1698 = vadd.f32 %v1647, %v1690
    %v1699 = vadd.f32 %v1650, %v1690
    %v1700 = vadd.f32 %v1655, %v1690
    %v1701 = vadd.f32 %v1658, %v1690
    %v1702 = vadd.f32 %v1663, %v1690
    %v1703 = vadd.f32 %v1666, %v1690
    %v1704 = vadd.f32 %v1671, %v1690
    %v1705 = vadd.f32 %v1674, %v1690
    %v1706 = vadd.f32 %v1679, %v1690
    %v1707 = vadd.f32 %v1682, %v1690
    %v1708 = vpack.c.bf16 %v1693, %v1692
    %v1709 = vpack.c.bf16 %v1695, %v1694
    %v1710 = vpack.c.bf16 %v1697, %v1696
    %v1711 = vpack.c.bf16 %v1699, %v1698
    %v1712 = vpack.c.bf16 %v1701, %v1700
    %v1713 = vpack.c.bf16 %v1703, %v1702
    %v1714 = vpack.c.bf16 %v1705, %v1704
    %v1715 = vpack.c.bf16 %v1707, %v1706
    %v1716 = vld [vmem:[%s1] sm:$0xf]
    %1717 = vmatprep.subr.bf16.mxu0 0
    %1718 = vmatpush1.bf16.msra.mxu0 %v1715
    %1719 = vmatprep.subr.bf16.mxu0 0
    %1720 = vmatpush1.bf16.msra.mxu0 %v1714
    %1721 = vmatprep.subr.bf16.mxu0 0
    %1722 = vmatpush1.bf16.msra.mxu0 %v1713
    %1723 = vmatprep.subr.bf16.mxu0 0
    %1724 = vmatpush1.bf16.msra.mxu0 %v1712
    %1725 = vmatprep.subr.bf16.mxu0 0
    %1726 = vmatpush1.bf16.msra.mxu0 %v1711
    %1727 = vmatprep.subr.bf16.mxu0 0
    %1728 = vmatpush1.bf16.msra.mxu0 %v1710
    %1729 = vmatprep.subr.bf16.mxu0 0
    %1730 = vmatpush1.bf16.msra.mxu0 %v1709
    %1731 = vmatprep.subr.bf16.mxu0 0
    %1732 = vmatpush1.bf16.msra.mxu0 %v1708
    %1733 = vmatprep.subr.bf16.mxu0 0
    %1734 = vmatpush2.bf16.msra.mxu0 0
    %1735 = vmatprep.subr.bf16.mxu0 0
    %1736 = vmatpush2.bf16.msra.mxu0 0
    %1737 = vmatprep.subr.bf16.mxu0 0
    %1738 = vmatpush2.bf16.msra.mxu0 0
    %1739 = vmatprep.subr.bf16.mxu0 0
    %1740 = vmatpush2.bf16.msra.mxu0 0
    %1741 = vmatprep.subr.bf16.mxu0 0
    %1742 = vmatpush2.bf16.msra.mxu0 0
    %1743 = vmatprep.subr.bf16.mxu0 0
    %1744 = vmatpush2.bf16.msra.mxu0 0
    %1745 = vmatprep.subr.bf16.mxu0 0
    %1746 = vmatpush2.bf16.msra.mxu0 0
    %1747 = vmatprep.subr.bf16.mxu0 0
    %1748 = vmatpush2.bf16.msra.mxu0 0
    %1749 = vmatprep.mubr.bf16.mxu0 0
    %1750 = vmatmul.mubr.bf16.gmra.mxu0 %v1716
    %v1751 = vpop.f32.mrf.mxu0
    %v1752 = vadd.f32 0.0, %v1751
    %v1753 = vpop.f32.mrf.mxu0
    %v1754 = vpop.f32.mrf.mxu0
    %v1755 = vpop.f32.mrf.mxu0
    %1756 = vdwg.mxu0
    %v1757 = vpack.c.bf16 %v1752, %v1752
    %v1758 = vld [vmem:[#allocation16] sm:$0xf]
    %v1759 = vld [vmem:[#allocation16 + $0x4] sm:$0xf]
    %v1760 = vld [vmem:[#allocation16 + $0x8] sm:$0xf]
    %v1761 = vld [vmem:[#allocation16 + $0xc] sm:$0xf]
    %v1762 = vld [vmem:[#allocation16 + $0x10] sm:$0xf]
    %v1763 = vld [vmem:[#allocation16 + $0x14] sm:$0xf]
    %v1764 = vld [vmem:[#allocation16 + $0x18] sm:$0xf]
    %v1765 = vld [vmem:[#allocation16 + $0x1c] sm:$0xf]
    %v1766 = vld [vmem:[#allocation16 + $0x20] sm:$0xf]
    %v1767 = vld [vmem:[#allocation16 + $0x24] sm:$0xf]
    %v1768 = vld [vmem:[#allocation16 + $0x28] sm:$0xf]
    %v1769 = vld [vmem:[#allocation16 + $0x2c] sm:$0xf]
    %v1770 = vld [vmem:[#allocation16 + $0x30] sm:$0xf]
    %v1771 = vld [vmem:[#allocation16 + $0x34] sm:$0xf]
    %v1772 = vld [vmem:[#allocation16 + $0x38] sm:$0xf]
    %v1773 = vld [vmem:[#allocation16 + $0x3c] sm:$0xf]
    %v1774 = vld [vmem:[%s13] sm:$0x1]
    %v1776 = vlaneseq
    %v1777 = vshrl.u32 %v1776, 7
    %v1778 = vsub.s32 0, %v1777
    %v1779 = vrot.slane %v1774, %v1778
    %v1797 = vunpack.c.l.b16 %v1758
    %v1798 = vunpack.c.l.b16 %v1759
    %v1799 = vunpack.c.l.b16 %v1760
    %v1800 = vunpack.c.l.b16 %v1761
    %v1801 = vunpack.c.l.b16 %v1762
    %v1802 = vunpack.c.l.b16 %v1763
    %v1803 = vunpack.c.l.b16 %v1764
    %v1804 = vunpack.c.l.b16 %v1765
    %v1805 = vunpack.c.l.b16 %v1766
    %v1806 = vunpack.c.l.b16 %v1767
    %v1807 = vunpack.c.l.b16 %v1768
    %v1808 = vunpack.c.l.b16 %v1769
    %v1809 = vunpack.c.l.b16 %v1770
    %v1810 = vunpack.c.l.b16 %v1771
    %v1811 = vunpack.c.l.b16 %v1772
    %v1812 = vunpack.c.l.b16 %v1773
    %v1813 = vpack.c.b16 %v1798, %v1797
    %v1814 = vpack.c.b16 %v1800, %v1799
    %v1815 = vpack.c.b16 %v1802, %v1801
    %v1816 = vpack.c.b16 %v1804, %v1803
    %v1817 = vpack.c.b16 %v1806, %v1805
    %v1818 = vpack.c.b16 %v1808, %v1807
    %v1819 = vpack.c.b16 %v1810, %v1809
    %v1820 = vpack.c.b16 %v1812, %v1811
    %1829 = vmatprep.subr.bf16.mxu0 0
    %1830 = vmatpush1.bf16.msra.mxu0 %v1820
    %1831 = vmatprep.subr.bf16.mxu0 0
    %1832 = vmatpush1.bf16.msra.mxu0 %v1819
    %1833 = vmatprep.subr.bf16.mxu0 0
    %1834 = vmatpush1.bf16.msra.mxu0 %v1818
    %1835 = vmatprep.subr.bf16.mxu0 0
    %1836 = vmatpush1.bf16.msra.mxu0 %v1817
    %1837 = vmatprep.subr.bf16.mxu0 0
    %1838 = vmatpush1.bf16.msra.mxu0 %v1816
    %1839 = vmatprep.subr.bf16.mxu0 0
    %1840 = vmatpush1.bf16.msra.mxu0 %v1815
    %1841 = vmatprep.subr.bf16.mxu0 0
    %1842 = vmatpush1.bf16.msra.mxu0 %v1814
    %1843 = vmatprep.subr.bf16.mxu0 0
    %1844 = vmatpush1.bf16.msra.mxu0 %v1813
    %1845 = vmatprep.subr.bf16.mxu0 0
    %1846 = vmatpush2.bf16.msra.mxu0 0
    %1847 = vmatprep.subr.bf16.mxu0 0
    %1848 = vmatpush2.bf16.msra.mxu0 0
    %1849 = vmatprep.subr.bf16.mxu0 0
    %1850 = vmatpush2.bf16.msra.mxu0 0
    %1851 = vmatprep.subr.bf16.mxu0 0
    %1852 = vmatpush2.bf16.msra.mxu0 0
    %1853 = vmatprep.subr.bf16.mxu0 0
    %1854 = vmatpush2.bf16.msra.mxu0 0
    %1855 = vmatprep.subr.bf16.mxu0 0
    %1856 = vmatpush2.bf16.msra.mxu0 0
    %1857 = vmatprep.subr.bf16.mxu0 0
    %1858 = vmatpush2.bf16.msra.mxu0 0
    %1859 = vmatprep.subr.bf16.mxu0 0
    %1860 = vmatpush2.bf16.msra.mxu0 0
    %1861 = vmatprep.mubr.bf16.mxu0 0
    %1862 = vmatmul.mubr.bf16.gmra.mxu0 %v1757
    %v1863 = vpop.f32.mrf.mxu0
    %v1864 = vadd.f32 %v1779, %v1863
    %v1865 = vpop.f32.mrf.mxu0
    %v1866 = vpop.f32.mrf.mxu0
    %v1867 = vpop.f32.mrf.mxu0
    %1868 = vdwg.mxu0
    %1869 = vst [vmem:[%s14] sm:$0xff] %v1864
    // Predicated region
    $region98: #{sage_forward.1} parent=1 // pred_check
      _
    $region99: #{sage_forward.1} parent=1 // pred_check_branch
      %1871 = sbr.rel (0) target = $region101
    $region100: #{sage_forward.1} parent=1 // pred_region
      _
    $region101: #{sage_forward.1} parent=1 // pred_fallthru
      _
    // Predicated region
    $region102: #{sage_forward.1} parent=1 // pred_check
      _
    $region103: #{sage_forward.1} parent=1 // pred_check_branch
      %1873 = sbr.rel (0) target = $region105
    $region104: #{sage_forward.1} parent=1 // pred_region
      _
    $region105: #{sage_forward.1} parent=1 // pred_fallthru
      _
    %1874 = vsyncpa [#allocation3], 1
    %1875 = vsyncpa [#allocation5], 1
    %1876 = vsyncpa [#allocation8], 1
    %1877 = vsyncpa [#allocation11], 1
    %1878 = vsyncpa [#allocation14], 1
    %1879 = vsyncpa [#allocation17], 1

</llo_original>
